<compile_context>
chip_gen: v7x
topology: tpu7x:2x2x1
jax: 0.10.0
libtpu: 0.0.40
codegen_flags: <defaults>
</compile_context>

<pallas_src>
import jax
import jax.numpy as jnp
import numpy as np
from jax import lax
from jax.experimental import pallas as pl
from jax.experimental.pallas import tpu as pltpu


def _round_up(x, m):
    return ((x + m - 1) // m) * m


def lstm_fused_kernel(chars_ref, w_x_ref, w_hh_ref, b_ref, w_fc_ref, b_fc_ref,
                      logits_ref, hn_ref, cn_ref,
                      gx_ref, h_all_ref):
    """Fused Embedding + LSTM + Linear forward (single invocation).

    chars_ref  : (T*Bp, 1) int32   token ids, batch-padded, time-major flattened
    w_x_ref    : (V, 4H)  bf16     embed-folded input->gate weights, order [i,f,o,g]
    w_hh_ref   : (H, 4H)  bf16     hidden->gate weights, order [i,f,o,g]
    b_ref      : (1, 4H)  f32      b_ih + b_hh, order [i,f,o,g]
    w_fc_ref   : (Hp, Vp) bf16     fc weights; rows >= H and cols >= V are zero
    b_fc_ref   : (1, Vp)  f32      fc bias (vocab padded)
    logits_ref : (T, Bp, Vp) f32   logits slab (lane-dense)
    hn_ref     : (Bp, H)  f32      final hidden state
    cn_ref     : (Bp, H)  f32      final cell state
    gx_ref     : VMEM (T*Bp, 4H) f32  scratch: precomputed input projections
    h_all_ref  : VMEM (T*Bp, Hp) f32  scratch: per-step hidden states, lane-padded
    """
    Bp, H = hn_ref.shape
    T = logits_ref.shape[0]
    Vp = logits_ref.shape[2]
    V = w_x_ref.shape[0]
    TB = T * Bp

    # ---- Phase 1: fused embedding lookup + input projection for all steps.
    # one_hot(chars) @ (E @ W_ih^T) == embed(chars) @ W_ih^T   (exact select)
    chars = chars_ref[...]                                          # (TB, 1) i32
    vocab_iota = lax.broadcasted_iota(jnp.int32, (TB, V), 1)
    onehot = jnp.where(chars == vocab_iota, 1.0, 0.0).astype(jnp.bfloat16)
    gx_ref[...] = (jnp.dot(onehot, w_x_ref[...],
                           preferred_element_type=jnp.float32)
                   + b_ref[...])

    # Zero the lane-padded hidden-state slab once (padding lanes must be 0
    # before the K=Hp FC matmul; VMEM scratch is otherwise uninitialized).
    h_all_ref[...] = jnp.zeros_like(h_all_ref)

    # Hoisted loop invariant.
    w_hh = w_hh_ref[...]                                            # (H, 4H) bf16

    h0 = jnp.zeros((Bp, H), jnp.float32)
    c0 = jnp.zeros((Bp, H), jnp.float32)

    # ---- Phase 2: serial time recurrence; only h @ W_hh^T + gate math per step.
    def step(t, carry):
        h, c = carry
        row = pl.multiple_of(t * Bp, Bp)                            # sublane-aligned
        gates = (gx_ref[pl.ds(row, Bp), :]
                 + jnp.dot(h.astype(jnp.bfloat16), w_hh,
                           preferred_element_type=jnp.float32))     # (Bp, 4H) f32
        # Gate order [i, f, o, g]: one sigmoid over 3H lanes, one tanh over H.
        sig = jax.nn.sigmoid(gates[:, 0:3 * H])
        g_t = jnp.tanh(gates[:, 3 * H:4 * H])
        i_g = sig[:, 0 * H:1 * H]
        f_g = sig[:, 1 * H:2 * H]
        o_g = sig[:, 2 * H:3 * H]
        c_new = f_g * c + i_g * g_t
        h_new = o_g * jnp.tanh(c_new)
        h_all_ref[pl.ds(row, Bp), pl.ds(0, H)] = h_new
        return (h_new, c_new)

    # Fully unrolled: latency-bound chain, give the scheduler the whole thing.
    h_fin, c_fin = lax.fori_loop(0, T, step, (h0, c0), unroll=True)

    # ---- Phase 3: deferred output projection, one lane-dense K=Hp matmul.
    logits = (jnp.dot(h_all_ref[...].astype(jnp.bfloat16), w_fc_ref[...],
                      preferred_element_type=jnp.float32)
              + b_fc_ref[...])                                      # (TB, Vp) f32
    logits_ref[...] = logits.reshape(T, Bp, Vp)

    hn_ref[...] = h_fin
    cn_ref[...] = c_fin


def lstm_generator_forward(characters, params):
    """characters: (T, B) int32.  Returns (logits (T,B,V), (h_n, c_n))."""
    embed_tbl = params["embed"]            # (V, E)
    w_ih = params["w_ih"]                  # (4H, E)  PyTorch layout, gates [i,f,g,o]
    w_hh = params["w_hh"]                  # (4H, H)
    b_ih = params["b_ih"]                  # (4H,)
    b_hh = params["b_hh"]                  # (4H,)
    w_fc = params["w_fc"]                  # (V, H)
    b_fc = params["b_fc"]                  # (V,)

    T, B = characters.shape
    V, E = embed_tbl.shape
    H = w_hh.shape[1]

    Bp = max(8, _round_up(B, 8))           # pad batch to f32 sublane count
    Vp = max(128, _round_up(V, 128))       # lane-dense logits
    Hp = max(128, _round_up(H, 128))       # lane-dense FC contraction dim

    # Gate reorder: PyTorch [i, f, g, o] -> [i, f, o, g] (sigmoid gates first).
    perm = np.concatenate([np.arange(0, 2 * H),          # i, f
                           np.arange(3 * H, 4 * H),      # o
                           np.arange(2 * H, 3 * H)])     # g

    # Fold the embedding table into the input projection (done once, tiny).
    w_x = (embed_tbl @ w_ih.T)[:, perm].astype(jnp.bfloat16)        # (V, 4H)
    w_hh_t = w_hh.T[:, perm].astype(jnp.bfloat16)                   # (H, 4H)
    b_sum = (b_ih + b_hh)[perm].reshape(1, 4 * H)                   # (1, 4H) f32

    w_fc_t = jnp.zeros((Hp, Vp), jnp.bfloat16)
    w_fc_t = w_fc_t.at[:H, :V].set(w_fc.T.astype(jnp.bfloat16))     # (Hp, Vp)
    b_fc_p = jnp.pad(b_fc, (0, Vp - V)).reshape(1, Vp)               # (1, Vp) f32

    chars_p = jnp.pad(characters.astype(jnp.int32),
                      ((0, 0), (0, Bp - B))).reshape(T * Bp, 1)      # (T*Bp, 1)

    out_shapes = (
        jax.ShapeDtypeStruct((T, Bp, Vp), jnp.float32),              # logits slab
        jax.ShapeDtypeStruct((Bp, H), jnp.float32),                  # h_n
        jax.ShapeDtypeStruct((Bp, H), jnp.float32),                  # c_n
    )
    vmem_spec = pl.BlockSpec(memory_space=pltpu.MemorySpace.VMEM)

    # VMEM budget sized from the actual footprint, with headroom.
    footprint = (
        T * Bp * 4                          # chars (i32)
        + V * 4 * H * 2                     # w_x (bf16)
        + H * 4 * H * 2                     # w_hh (bf16)
        + 4 * H * 4 + Vp * 4                # biases (f32)
        + Hp * Vp * 2                       # w_fc (bf16)
        + T * Bp * Vp * 4                   # logits
        + 2 * Bp * H * 4                    # h_n, c_n
        + T * Bp * 4 * H * 4                # gx scratch
        + T * Bp * Hp * 4                   # h_all scratch
    )
    vmem_limit = int(min(max(4 << 20, 4 * footprint), 100 << 20))

    logits_p, h_n, c_n = pl.pallas_call(
        lstm_fused_kernel,
        out_shape=out_shapes,
        in_specs=[vmem_spec] * 6,
        out_specs=(vmem_spec, vmem_spec, vmem_spec),
        scratch_shapes=[
            pltpu.VMEM((T * Bp, 4 * H), jnp.float32),   # gx: precomputed x-projections
            pltpu.VMEM((T * Bp, Hp), jnp.float32),      # h_all: lane-padded hidden states
        ],
        compiler_params=pltpu.CompilerParams(vmem_limit_bytes=vmem_limit),
    )(chars_p, w_x, w_hh_t, b_sum, w_fc_t, b_fc_p)

    # Padded slab -> module-shaped outputs (tiny here; at real vocab sizes keep
    # the padded slab and slice lazily at the consumer).
    logits = logits_p[:, :B, :V]
    h_n = h_n[None, :B, :]
    c_n = c_n[None, :B, :]
    return logits, (h_n, c_n)


def reference_forward(characters, params):
    """Pure-JAX f32 reference mirroring the PyTorch module semantics."""
    embed_tbl = params["embed"]
    w_ih, w_hh = params["w_ih"], params["w_hh"]
    b = params["b_ih"] + params["b_hh"]
    w_fc, b_fc = params["w_fc"], params["b_fc"]
    H = w_hh.shape[1]

    emb = jnp.take(embed_tbl, characters, axis=0)             # (T, B, E)

    def step(carry, x_t):
        h, c = carry
        gates = x_t @ w_ih.T + h @ w_hh.T + b
        i = jax.nn.sigmoid(gates[:, 0 * H:1 * H])
        f = jax.nn.sigmoid(gates[:, 1 * H:2 * H])
        g = jnp.tanh(gates[:, 2 * H:3 * H])
        o = jax.nn.sigmoid(gates[:, 3 * H:4 * H])
        c = f * c + i * g
        h = o * jnp.tanh(c)
        return (h, c), h

    B = characters.shape[1]
    h0 = jnp.zeros((B, H), jnp.float32)
    c0 = jnp.zeros((B, H), jnp.float32)
    (h_n, c_n), hs = lax.scan(step, (h0, c0), emb)
    logits = hs @ w_fc.T + b_fc
    return logits, (h_n[None], c_n[None])


def init_params(key, vocab, embed, hidden):
    ks = jax.random.split(key, 7)
    s = 0.1
    return {
        "embed": jax.random.normal(ks[0], (vocab, embed), jnp.float32) * s,
        "w_ih":  jax.random.normal(ks[1], (4 * hidden, embed), jnp.float32) * s,
        "w_hh":  jax.random.normal(ks[2], (4 * hidden, hidden), jnp.float32) * s,
        "b_ih":  jax.random.normal(ks[3], (4 * hidden,), jnp.float32) * s,
        "b_hh":  jax.random.normal(ks[4], (4 * hidden,), jnp.float32) * s,
        "w_fc":  jax.random.normal(ks[5], (vocab, hidden), jnp.float32) * s,
        "b_fc":  jax.random.normal(ks[6], (vocab,), jnp.float32) * s,
    }


if __name__ == "__main__":
    VOCAB, EMBED, HIDDEN = 32, 16, 32   # input_output_size, embed_size, hidden_size
    T, B = 8, 4                          # seq length, batch

    key = jax.random.PRNGKey(0)
    kp, kc = jax.random.split(key)
    params = init_params(kp, VOCAB, EMBED, HIDDEN)
    characters = jax.random.randint(kc, (T, B), 0, VOCAB, dtype=jnp.int32)

    logits, (h_n, c_n) = lstm_generator_forward(characters, params)
    logits = jax.block_until_ready(logits)
    h_n = jax.block_until_ready(h_n)
    c_n = jax.block_until_ready(c_n)

    ref_logits, (ref_h, ref_c) = reference_forward(characters, params)
    # bf16 MXU operands (f32 accumulation) vs the f32 reference -> loosened tol.
    np.testing.assert_allclose(np.asarray(logits), np.asarray(ref_logits),
                               rtol=2e-2, atol=2e-2)
    np.testing.assert_allclose(np.asarray(h_n), np.asarray(ref_h),
                               rtol=2e-2, atol=2e-2)
    np.testing.assert_allclose(np.asarray(c_n), np.asarray(ref_c),
                               rtol=2e-2, atol=2e-2)

    print("KERNEL_OK")
</pallas_src>

<mosaic_0001>
module attributes {stable_mosaic.version = 11 : i64} {
  func.func @lstm_fused_kernel(%arg0: memref<64x1xi32, #tpu.memory_space<vmem>>, %arg1: memref<32x128xbf16, #tpu.memory_space<vmem>>, %arg2: memref<32x128xbf16, #tpu.memory_space<vmem>>, %arg3: memref<1x128xf32, #tpu.memory_space<vmem>>, %arg4: memref<128x128xbf16, #tpu.memory_space<vmem>>, %arg5: memref<1x128xf32, #tpu.memory_space<vmem>>, %arg6: memref<8x8x128xf32, #tpu.memory_space<vmem>>, %arg7: memref<8x32xf32, #tpu.memory_space<vmem>>, %arg8: memref<8x32xf32, #tpu.memory_space<vmem>>, %arg9: memref<64x128xf32, #tpu.memory_space<vmem>>, %arg10: memref<64x128xf32, #tpu.memory_space<vmem>>) attributes {dimension_semantics = [], scalar_prefetch = 0 : i64, scratch_operands = 2 : i64, tpu.core_type = #tpu.core_type<tc>} {
    %c0 = arith.constant 0 : index
    %c0_0 = arith.constant 0 : index
    %0 = vector.load %arg0[%c0, %c0_0] : memref<64x1xi32, #tpu.memory_space<vmem>>, vector<64x1xi32>
    %1 = tpu.iota {dimensions = array<i32: 1>} : vector<64x32xi32>
    %2 = vector.broadcast %0 : vector<64x1xi32> to vector<64x32xi32>
    %3 = arith.cmpi eq, %2, %1 : vector<64x32xi32>
    %cst = arith.constant 1.000000e+00 : f32
    %cst_1 = arith.constant 0.000000e+00 : f32
    %4 = vector.broadcast %cst : f32 to vector<64x32xf32>
    %5 = vector.broadcast %cst_1 : f32 to vector<64x32xf32>
    %6 = arith.select %3, %4, %5 : vector<64x32xi1>, vector<64x32xf32>
    %7 = arith.truncf %6 : vector<64x32xf32> to vector<64x32xbf16>
    %c0_2 = arith.constant 0 : index
    %c0_3 = arith.constant 0 : index
    %8 = vector.load %arg1[%c0_2, %c0_3] : memref<32x128xbf16, #tpu.memory_space<vmem>>, vector<32x128xbf16>
    %cst_4 = arith.constant dense<0.000000e+00> : vector<64x128xf32>
    %9 = tpu.matmul %7, %8, %cst_4 {dimension_numbers = #tpu.dot_dimension_numbers<[1], [0], [0], [1], [0, 0, 1, 1], [], []>} : vector<64x32xbf16>, vector<32x128xbf16>, vector<64x128xf32> -> vector<64x128xf32>
    %c0_5 = arith.constant 0 : index
    %c0_6 = arith.constant 0 : index
    %10 = vector.load %arg3[%c0_5, %c0_6] : memref<1x128xf32, #tpu.memory_space<vmem>>, vector<1x128xf32>
    %11 = vector.broadcast %10 : vector<1x128xf32> to vector<64x128xf32>
    %12 = arith.addf %9, %11 : vector<64x128xf32>
    %c0_7 = arith.constant 0 : index
    %c0_8 = arith.constant 0 : index
    %13 = vector.load %arg9[%c0_7, %c0_8] : memref<64x128xf32, #tpu.memory_space<vmem>>, vector<64x128xf32>
    tpu.vector_store %arg9[%c0_7, %c0_8], %12 {strides = array<i32>} : memref<64x128xf32, #tpu.memory_space<vmem>>, vector<64x128xf32>,
    %cst_9 = arith.constant 0.000000e+00 : f32
    %14 = vector.broadcast %cst_9 : f32 to vector<64x128xf32>
    %c0_10 = arith.constant 0 : index
    %c0_11 = arith.constant 0 : index
    %15 = vector.load %arg10[%c0_10, %c0_11] : memref<64x128xf32, #tpu.memory_space<vmem>>, vector<64x128xf32>
    tpu.vector_store %arg10[%c0_10, %c0_11], %14 {strides = array<i32>} : memref<64x128xf32, #tpu.memory_space<vmem>>, vector<64x128xf32>,
    %c0_12 = arith.constant 0 : index
    %c0_13 = arith.constant 0 : index
    %16 = vector.load %arg2[%c0_12, %c0_13] : memref<32x128xbf16, #tpu.memory_space<vmem>>, vector<32x128xbf16>
    %cst_14 = arith.constant 0.000000e+00 : f32
    %17 = vector.broadcast %cst_14 : f32 to vector<8x32xf32>
    %cst_15 = arith.constant 0.000000e+00 : f32
    %18 = vector.broadcast %cst_15 : f32 to vector<8x32xf32>
    %c0_i32 = arith.constant 0 : i32
    %c8_i32 = arith.constant 8 : i32
    %19 = arith.muli %c0_i32, %c8_i32 : i32
    %20 = tpu.assume_multiple %19, 8 : i32
    %21 = arith.index_cast %20 : i32 to index
    %c0_16 = arith.constant 0 : index
    %22 = vector.load %arg9[%21, %c0_16] : memref<64x128xf32, #tpu.memory_space<vmem>>, vector<8x128xf32>
    %23 = arith.truncf %17 : vector<8x32xf32> to vector<8x32xbf16>
    %cst_17 = arith.constant dense<0.000000e+00> : vector<8x128xf32>
    %24 = tpu.matmul %23, %16, %cst_17 {dimension_numbers = #tpu.dot_dimension_numbers<[1], [0], [0], [1], [0, 0, 1, 1], [], []>} : vector<8x32xbf16>, vector<32x128xbf16>, vector<8x128xf32> -> vector<8x128xf32>
    %25 = arith.addf %22, %24 : vector<8x128xf32>
    %26 = vector.extract_strided_slice %25 {offsets = [0, 0], sizes = [8, 96], strides = [1, 1]} : vector<8x128xf32> to vector<8x96xf32>
    %27 = arith.negf %26 : vector<8x96xf32>
    %28 = math.exp %27 : vector<8x96xf32>
    %cst_18 = arith.constant 1.000000e+00 : f32
    %29 = vector.broadcast %cst_18 : f32 to vector<8x96xf32>
    %30 = arith.addf %29, %28 : vector<8x96xf32>
    %31 = arith.divf %29, %30 : vector<8x96xf32>
    %32 = vector.extract_strided_slice %25 {offsets = [0, 96], sizes = [8, 32], strides = [1, 1]} : vector<8x128xf32> to vector<8x32xf32>
    %33 = math.tanh %32 : vector<8x32xf32>
    %34 = vector.extract_strided_slice %31 {offsets = [0, 0], sizes = [8, 32], strides = [1, 1]} : vector<8x96xf32> to vector<8x32xf32>
    %35 = vector.extract_strided_slice %31 {offsets = [0, 32], sizes = [8, 32], strides = [1, 1]} : vector<8x96xf32> to vector<8x32xf32>
    %36 = vector.extract_strided_slice %31 {offsets = [0, 64], sizes = [8, 32], strides = [1, 1]} : vector<8x96xf32> to vector<8x32xf32>
    %37 = arith.mulf %35, %18 : vector<8x32xf32>
    %38 = arith.mulf %34, %33 : vector<8x32xf32>
    %39 = arith.addf %37, %38 : vector<8x32xf32>
    %40 = math.tanh %39 : vector<8x32xf32>
    %41 = arith.mulf %36, %40 : vector<8x32xf32>
    %42 = arith.index_cast %20 : i32 to index
    %c0_19 = arith.constant 0 : index
    %43 = vector.load %arg10[%42, %c0_19] : memref<64x128xf32, #tpu.memory_space<vmem>>, vector<8x32xf32>
    tpu.vector_store %arg10[%42, %c0_19], %41 {strides = array<i32>} : memref<64x128xf32, #tpu.memory_space<vmem>>, vector<8x32xf32>,
    %c1_i32 = arith.constant 1 : i32
    %c8_i32_20 = arith.constant 8 : i32
    %44 = arith.muli %c1_i32, %c8_i32_20 : i32
    %45 = tpu.assume_multiple %44, 8 : i32
    %46 = arith.index_cast %45 : i32 to index
    %c0_21 = arith.constant 0 : index
    %47 = vector.load %arg9[%46, %c0_21] : memref<64x128xf32, #tpu.memory_space<vmem>>, vector<8x128xf32>
    %48 = arith.truncf %41 : vector<8x32xf32> to vector<8x32xbf16>
    %cst_22 = arith.constant dense<0.000000e+00> : vector<8x128xf32>
    %49 = tpu.matmul %48, %16, %cst_22 {dimension_numbers = #tpu.dot_dimension_numbers<[1], [0], [0], [1], [0, 0, 1, 1], [], []>} : vector<8x32xbf16>, vector<32x128xbf16>, vector<8x128xf32> -> vector<8x128xf32>
    %50 = arith.addf %47, %49 : vector<8x128xf32>
    %51 = vector.extract_strided_slice %50 {offsets = [0, 0], sizes = [8, 96], strides = [1, 1]} : vector<8x128xf32> to vector<8x96xf32>
    %52 = arith.negf %51 : vector<8x96xf32>
    %53 = math.exp %52 : vector<8x96xf32>
    %cst_23 = arith.constant 1.000000e+00 : f32
    %54 = vector.broadcast %cst_23 : f32 to vector<8x96xf32>
    %55 = arith.addf %54, %53 : vector<8x96xf32>
    %56 = arith.divf %54, %55 : vector<8x96xf32>
    %57 = vector.extract_strided_slice %50 {offsets = [0, 96], sizes = [8, 32], strides = [1, 1]} : vector<8x128xf32> to vector<8x32xf32>
    %58 = math.tanh %57 : vector<8x32xf32>
    %59 = vector.extract_strided_slice %56 {offsets = [0, 0], sizes = [8, 32], strides = [1, 1]} : vector<8x96xf32> to vector<8x32xf32>
    %60 = vector.extract_strided_slice %56 {offsets = [0, 32], sizes = [8, 32], strides = [1, 1]} : vector<8x96xf32> to vector<8x32xf32>
    %61 = vector.extract_strided_slice %56 {offsets = [0, 64], sizes = [8, 32], strides = [1, 1]} : vector<8x96xf32> to vector<8x32xf32>
    %62 = arith.mulf %60, %39 : vector<8x32xf32>
    %63 = arith.mulf %59, %58 : vector<8x32xf32>
    %64 = arith.addf %62, %63 : vector<8x32xf32>
    %65 = math.tanh %64 : vector<8x32xf32>
    %66 = arith.mulf %61, %65 : vector<8x32xf32>
    %67 = arith.index_cast %45 : i32 to index
    %c0_24 = arith.constant 0 : index
    %68 = vector.load %arg10[%67, %c0_24] : memref<64x128xf32, #tpu.memory_space<vmem>>, vector<8x32xf32>
    tpu.vector_store %arg10[%67, %c0_24], %66 {strides = array<i32>} : memref<64x128xf32, #tpu.memory_space<vmem>>, vector<8x32xf32>,
    %c2_i32 = arith.constant 2 : i32
    %c8_i32_25 = arith.constant 8 : i32
    %69 = arith.muli %c2_i32, %c8_i32_25 : i32
    %70 = tpu.assume_multiple %69, 8 : i32
    %71 = arith.index_cast %70 : i32 to index
    %c0_26 = arith.constant 0 : index
    %72 = vector.load %arg9[%71, %c0_26] : memref<64x128xf32, #tpu.memory_space<vmem>>, vector<8x128xf32>
    %73 = arith.truncf %66 : vector<8x32xf32> to vector<8x32xbf16>
    %cst_27 = arith.constant dense<0.000000e+00> : vector<8x128xf32>
    %74 = tpu.matmul %73, %16, %cst_27 {dimension_numbers = #tpu.dot_dimension_numbers<[1], [0], [0], [1], [0, 0, 1, 1], [], []>} : vector<8x32xbf16>, vector<32x128xbf16>, vector<8x128xf32> -> vector<8x128xf32>
    %75 = arith.addf %72, %74 : vector<8x128xf32>
    %76 = vector.extract_strided_slice %75 {offsets = [0, 0], sizes = [8, 96], strides = [1, 1]} : vector<8x128xf32> to vector<8x96xf32>
    %77 = arith.negf %76 : vector<8x96xf32>
    %78 = math.exp %77 : vector<8x96xf32>
    %cst_28 = arith.constant 1.000000e+00 : f32
    %79 = vector.broadcast %cst_28 : f32 to vector<8x96xf32>
    %80 = arith.addf %79, %78 : vector<8x96xf32>
    %81 = arith.divf %79, %80 : vector<8x96xf32>
    %82 = vector.extract_strided_slice %75 {offsets = [0, 96], sizes = [8, 32], strides = [1, 1]} : vector<8x128xf32> to vector<8x32xf32>
    %83 = math.tanh %82 : vector<8x32xf32>
    %84 = vector.extract_strided_slice %81 {offsets = [0, 0], sizes = [8, 32], strides = [1, 1]} : vector<8x96xf32> to vector<8x32xf32>
    %85 = vector.extract_strided_slice %81 {offsets = [0, 32], sizes = [8, 32], strides = [1, 1]} : vector<8x96xf32> to vector<8x32xf32>
    %86 = vector.extract_strided_slice %81 {offsets = [0, 64], sizes = [8, 32], strides = [1, 1]} : vector<8x96xf32> to vector<8x32xf32>
    %87 = arith.mulf %85, %64 : vector<8x32xf32>
    %88 = arith.mulf %84, %83 : vector<8x32xf32>
    %89 = arith.addf %87, %88 : vector<8x32xf32>
    %90 = math.tanh %89 : vector<8x32xf32>
    %91 = arith.mulf %86, %90 : vector<8x32xf32>
    %92 = arith.index_cast %70 : i32 to index
    %c0_29 = arith.constant 0 : index
    %93 = vector.load %arg10[%92, %c0_29] : memref<64x128xf32, #tpu.memory_space<vmem>>, vector<8x32xf32>
    tpu.vector_store %arg10[%92, %c0_29], %91 {strides = array<i32>} : memref<64x128xf32, #tpu.memory_space<vmem>>, vector<8x32xf32>,
    %c3_i32 = arith.constant 3 : i32
    %c8_i32_30 = arith.constant 8 : i32
    %94 = arith.muli %c3_i32, %c8_i32_30 : i32
    %95 = tpu.assume_multiple %94, 8 : i32
    %96 = arith.index_cast %95 : i32 to index
    %c0_31 = arith.constant 0 : index
    %97 = vector.load %arg9[%96, %c0_31] : memref<64x128xf32, #tpu.memory_space<vmem>>, vector<8x128xf32>
    %98 = arith.truncf %91 : vector<8x32xf32> to vector<8x32xbf16>
    %cst_32 = arith.constant dense<0.000000e+00> : vector<8x128xf32>
    %99 = tpu.matmul %98, %16, %cst_32 {dimension_numbers = #tpu.dot_dimension_numbers<[1], [0], [0], [1], [0, 0, 1, 1], [], []>} : vector<8x32xbf16>, vector<32x128xbf16>, vector<8x128xf32> -> vector<8x128xf32>
    %100 = arith.addf %97, %99 : vector<8x128xf32>
    %101 = vector.extract_strided_slice %100 {offsets = [0, 0], sizes = [8, 96], strides = [1, 1]} : vector<8x128xf32> to vector<8x96xf32>
    %102 = arith.negf %101 : vector<8x96xf32>
    %103 = math.exp %102 : vector<8x96xf32>
    %cst_33 = arith.constant 1.000000e+00 : f32
    %104 = vector.broadcast %cst_33 : f32 to vector<8x96xf32>
    %105 = arith.addf %104, %103 : vector<8x96xf32>
    %106 = arith.divf %104, %105 : vector<8x96xf32>
    %107 = vector.extract_strided_slice %100 {offsets = [0, 96], sizes = [8, 32], strides = [1, 1]} : vector<8x128xf32> to vector<8x32xf32>
    %108 = math.tanh %107 : vector<8x32xf32>
    %109 = vector.extract_strided_slice %106 {offsets = [0, 0], sizes = [8, 32], strides = [1, 1]} : vector<8x96xf32> to vector<8x32xf32>
    %110 = vector.extract_strided_slice %106 {offsets = [0, 32], sizes = [8, 32], strides = [1, 1]} : vector<8x96xf32> to vector<8x32xf32>
    %111 = vector.extract_strided_slice %106 {offsets = [0, 64], sizes = [8, 32], strides = [1, 1]} : vector<8x96xf32> to vector<8x32xf32>
    %112 = arith.mulf %110, %89 : vector<8x32xf32>
    %113 = arith.mulf %109, %108 : vector<8x32xf32>
    %114 = arith.addf %112, %113 : vector<8x32xf32>
    %115 = math.tanh %114 : vector<8x32xf32>
    %116 = arith.mulf %111, %115 : vector<8x32xf32>
    %117 = arith.index_cast %95 : i32 to index
    %c0_34 = arith.constant 0 : index
    %118 = vector.load %arg10[%117, %c0_34] : memref<64x128xf32, #tpu.memory_space<vmem>>, vector<8x32xf32>
    tpu.vector_store %arg10[%117, %c0_34], %116 {strides = array<i32>} : memref<64x128xf32, #tpu.memory_space<vmem>>, vector<8x32xf32>,
    %c4_i32 = arith.constant 4 : i32
    %c8_i32_35 = arith.constant 8 : i32
    %119 = arith.muli %c4_i32, %c8_i32_35 : i32
    %120 = tpu.assume_multiple %119, 8 : i32
    %121 = arith.index_cast %120 : i32 to index
    %c0_36 = arith.constant 0 : index
    %122 = vector.load %arg9[%121, %c0_36] : memref<64x128xf32, #tpu.memory_space<vmem>>, vector<8x128xf32>
    %123 = arith.truncf %116 : vector<8x32xf32> to vector<8x32xbf16>
    %cst_37 = arith.constant dense<0.000000e+00> : vector<8x128xf32>
    %124 = tpu.matmul %123, %16, %cst_37 {dimension_numbers = #tpu.dot_dimension_numbers<[1], [0], [0], [1], [0, 0, 1, 1], [], []>} : vector<8x32xbf16>, vector<32x128xbf16>, vector<8x128xf32> -> vector<8x128xf32>
    %125 = arith.addf %122, %124 : vector<8x128xf32>
    %126 = vector.extract_strided_slice %125 {offsets = [0, 0], sizes = [8, 96], strides = [1, 1]} : vector<8x128xf32> to vector<8x96xf32>
    %127 = arith.negf %126 : vector<8x96xf32>
    %128 = math.exp %127 : vector<8x96xf32>
    %cst_38 = arith.constant 1.000000e+00 : f32
    %129 = vector.broadcast %cst_38 : f32 to vector<8x96xf32>
    %130 = arith.addf %129, %128 : vector<8x96xf32>
    %131 = arith.divf %129, %130 : vector<8x96xf32>
    %132 = vector.extract_strided_slice %125 {offsets = [0, 96], sizes = [8, 32], strides = [1, 1]} : vector<8x128xf32> to vector<8x32xf32>
    %133 = math.tanh %132 : vector<8x32xf32>
    %134 = vector.extract_strided_slice %131 {offsets = [0, 0], sizes = [8, 32], strides = [1, 1]} : vector<8x96xf32> to vector<8x32xf32>
    %135 = vector.extract_strided_slice %131 {offsets = [0, 32], sizes = [8, 32], strides = [1, 1]} : vector<8x96xf32> to vector<8x32xf32>
    %136 = vector.extract_strided_slice %131 {offsets = [0, 64], sizes = [8, 32], strides = [1, 1]} : vector<8x96xf32> to vector<8x32xf32>
    %137 = arith.mulf %135, %114 : vector<8x32xf32>
    %138 = arith.mulf %134, %133 : vector<8x32xf32>
    %139 = arith.addf %137, %138 : vector<8x32xf32>
    %140 = math.tanh %139 : vector<8x32xf32>
    %141 = arith.mulf %136, %140 : vector<8x32xf32>
    %142 = arith.index_cast %120 : i32 to index
    %c0_39 = arith.constant 0 : index
    %143 = vector.load %arg10[%142, %c0_39] : memref<64x128xf32, #tpu.memory_space<vmem>>, vector<8x32xf32>
    tpu.vector_store %arg10[%142, %c0_39], %141 {strides = array<i32>} : memref<64x128xf32, #tpu.memory_space<vmem>>, vector<8x32xf32>,
    %c5_i32 = arith.constant 5 : i32
    %c8_i32_40 = arith.constant 8 : i32
    %144 = arith.muli %c5_i32, %c8_i32_40 : i32
    %145 = tpu.assume_multiple %144, 8 : i32
    %146 = arith.index_cast %145 : i32 to index
    %c0_41 = arith.constant 0 : index
    %147 = vector.load %arg9[%146, %c0_41] : memref<64x128xf32, #tpu.memory_space<vmem>>, vector<8x128xf32>
    %148 = arith.truncf %141 : vector<8x32xf32> to vector<8x32xbf16>
    %cst_42 = arith.constant dense<0.000000e+00> : vector<8x128xf32>
    %149 = tpu.matmul %148, %16, %cst_42 {dimension_numbers = #tpu.dot_dimension_numbers<[1], [0], [0], [1], [0, 0, 1, 1], [], []>} : vector<8x32xbf16>, vector<32x128xbf16>, vector<8x128xf32> -> vector<8x128xf32>
    %150 = arith.addf %147, %149 : vector<8x128xf32>
    %151 = vector.extract_strided_slice %150 {offsets = [0, 0], sizes = [8, 96], strides = [1, 1]} : vector<8x128xf32> to vector<8x96xf32>
    %152 = arith.negf %151 : vector<8x96xf32>
    %153 = math.exp %152 : vector<8x96xf32>
    %cst_43 = arith.constant 1.000000e+00 : f32
    %154 = vector.broadcast %cst_43 : f32 to vector<8x96xf32>
    %155 = arith.addf %154, %153 : vector<8x96xf32>
    %156 = arith.divf %154, %155 : vector<8x96xf32>
    %157 = vector.extract_strided_slice %150 {offsets = [0, 96], sizes = [8, 32], strides = [1, 1]} : vector<8x128xf32> to vector<8x32xf32>
    %158 = math.tanh %157 : vector<8x32xf32>
    %159 = vector.extract_strided_slice %156 {offsets = [0, 0], sizes = [8, 32], strides = [1, 1]} : vector<8x96xf32> to vector<8x32xf32>
    %160 = vector.extract_strided_slice %156 {offsets = [0, 32], sizes = [8, 32], strides = [1, 1]} : vector<8x96xf32> to vector<8x32xf32>
    %161 = vector.extract_strided_slice %156 {offsets = [0, 64], sizes = [8, 32], strides = [1, 1]} : vector<8x96xf32> to vector<8x32xf32>
    %162 = arith.mulf %160, %139 : vector<8x32xf32>
    %163 = arith.mulf %159, %158 : vector<8x32xf32>
    %164 = arith.addf %162, %163 : vector<8x32xf32>
    %165 = math.tanh %164 : vector<8x32xf32>
    %166 = arith.mulf %161, %165 : vector<8x32xf32>
    %167 = arith.index_cast %145 : i32 to index
    %c0_44 = arith.constant 0 : index
    %168 = vector.load %arg10[%167, %c0_44] : memref<64x128xf32, #tpu.memory_space<vmem>>, vector<8x32xf32>
    tpu.vector_store %arg10[%167, %c0_44], %166 {strides = array<i32>} : memref<64x128xf32, #tpu.memory_space<vmem>>, vector<8x32xf32>,
    %c6_i32 = arith.constant 6 : i32
    %c8_i32_45 = arith.constant 8 : i32
    %169 = arith.muli %c6_i32, %c8_i32_45 : i32
    %170 = tpu.assume_multiple %169, 8 : i32
    %171 = arith.index_cast %170 : i32 to index
    %c0_46 = arith.constant 0 : index
    %172 = vector.load %arg9[%171, %c0_46] : memref<64x128xf32, #tpu.memory_space<vmem>>, vector<8x128xf32>
    %173 = arith.truncf %166 : vector<8x32xf32> to vector<8x32xbf16>
    %cst_47 = arith.constant dense<0.000000e+00> : vector<8x128xf32>
    %174 = tpu.matmul %173, %16, %cst_47 {dimension_numbers = #tpu.dot_dimension_numbers<[1], [0], [0], [1], [0, 0, 1, 1], [], []>} : vector<8x32xbf16>, vector<32x128xbf16>, vector<8x128xf32> -> vector<8x128xf32>
    %175 = arith.addf %172, %174 : vector<8x128xf32>
    %176 = vector.extract_strided_slice %175 {offsets = [0, 0], sizes = [8, 96], strides = [1, 1]} : vector<8x128xf32> to vector<8x96xf32>
    %177 = arith.negf %176 : vector<8x96xf32>
    %178 = math.exp %177 : vector<8x96xf32>
    %cst_48 = arith.constant 1.000000e+00 : f32
    %179 = vector.broadcast %cst_48 : f32 to vector<8x96xf32>
    %180 = arith.addf %179, %178 : vector<8x96xf32>
    %181 = arith.divf %179, %180 : vector<8x96xf32>
    %182 = vector.extract_strided_slice %175 {offsets = [0, 96], sizes = [8, 32], strides = [1, 1]} : vector<8x128xf32> to vector<8x32xf32>
    %183 = math.tanh %182 : vector<8x32xf32>
    %184 = vector.extract_strided_slice %181 {offsets = [0, 0], sizes = [8, 32], strides = [1, 1]} : vector<8x96xf32> to vector<8x32xf32>
    %185 = vector.extract_strided_slice %181 {offsets = [0, 32], sizes = [8, 32], strides = [1, 1]} : vector<8x96xf32> to vector<8x32xf32>
    %186 = vector.extract_strided_slice %181 {offsets = [0, 64], sizes = [8, 32], strides = [1, 1]} : vector<8x96xf32> to vector<8x32xf32>
    %187 = arith.mulf %185, %164 : vector<8x32xf32>
    %188 = arith.mulf %184, %183 : vector<8x32xf32>
    %189 = arith.addf %187, %188 : vector<8x32xf32>
    %190 = math.tanh %189 : vector<8x32xf32>
    %191 = arith.mulf %186, %190 : vector<8x32xf32>
    %192 = arith.index_cast %170 : i32 to index
    %c0_49 = arith.constant 0 : index
    %193 = vector.load %arg10[%192, %c0_49] : memref<64x128xf32, #tpu.memory_space<vmem>>, vector<8x32xf32>
    tpu.vector_store %arg10[%192, %c0_49], %191 {strides = array<i32>} : memref<64x128xf32, #tpu.memory_space<vmem>>, vector<8x32xf32>,
    %c7_i32 = arith.constant 7 : i32
    %c8_i32_50 = arith.constant 8 : i32
    %194 = arith.muli %c7_i32, %c8_i32_50 : i32
    %195 = tpu.assume_multiple %194, 8 : i32
    %196 = arith.index_cast %195 : i32 to index
    %c0_51 = arith.constant 0 : index
    %197 = vector.load %arg9[%196, %c0_51] : memref<64x128xf32, #tpu.memory_space<vmem>>, vector<8x128xf32>
    %198 = arith.truncf %191 : vector<8x32xf32> to vector<8x32xbf16>
    %cst_52 = arith.constant dense<0.000000e+00> : vector<8x128xf32>
    %199 = tpu.matmul %198, %16, %cst_52 {dimension_numbers = #tpu.dot_dimension_numbers<[1], [0], [0], [1], [0, 0, 1, 1], [], []>} : vector<8x32xbf16>, vector<32x128xbf16>, vector<8x128xf32> -> vector<8x128xf32>
    %200 = arith.addf %197, %199 : vector<8x128xf32>
    %201 = vector.extract_strided_slice %200 {offsets = [0, 0], sizes = [8, 96], strides = [1, 1]} : vector<8x128xf32> to vector<8x96xf32>
    %202 = arith.negf %201 : vector<8x96xf32>
    %203 = math.exp %202 : vector<8x96xf32>
    %cst_53 = arith.constant 1.000000e+00 : f32
    %204 = vector.broadcast %cst_53 : f32 to vector<8x96xf32>
    %205 = arith.addf %204, %203 : vector<8x96xf32>
    %206 = arith.divf %204, %205 : vector<8x96xf32>
    %207 = vector.extract_strided_slice %200 {offsets = [0, 96], sizes = [8, 32], strides = [1, 1]} : vector<8x128xf32> to vector<8x32xf32>
    %208 = math.tanh %207 : vector<8x32xf32>
    %209 = vector.extract_strided_slice %206 {offsets = [0, 0], sizes = [8, 32], strides = [1, 1]} : vector<8x96xf32> to vector<8x32xf32>
    %210 = vector.extract_strided_slice %206 {offsets = [0, 32], sizes = [8, 32], strides = [1, 1]} : vector<8x96xf32> to vector<8x32xf32>
    %211 = vector.extract_strided_slice %206 {offsets = [0, 64], sizes = [8, 32], strides = [1, 1]} : vector<8x96xf32> to vector<8x32xf32>
    %212 = arith.mulf %210, %189 : vector<8x32xf32>
    %213 = arith.mulf %209, %208 : vector<8x32xf32>
    %214 = arith.addf %212, %213 : vector<8x32xf32>
    %215 = math.tanh %214 : vector<8x32xf32>
    %216 = arith.mulf %211, %215 : vector<8x32xf32>
    %217 = arith.index_cast %195 : i32 to index
    %c0_54 = arith.constant 0 : index
    %218 = vector.load %arg10[%217, %c0_54] : memref<64x128xf32, #tpu.memory_space<vmem>>, vector<8x32xf32>
    tpu.vector_store %arg10[%217, %c0_54], %216 {strides = array<i32>} : memref<64x128xf32, #tpu.memory_space<vmem>>, vector<8x32xf32>,
    %c8_i32_55 = arith.constant 8 : i32
    %c0_56 = arith.constant 0 : index
    %c0_57 = arith.constant 0 : index
    %219 = vector.load %arg10[%c0_56, %c0_57] : memref<64x128xf32, #tpu.memory_space<vmem>>, vector<64x128xf32>
    %220 = arith.truncf %219 : vector<64x128xf32> to vector<64x128xbf16>
    %c0_58 = arith.constant 0 : index
    %c0_59 = arith.constant 0 : index
    %221 = vector.load %arg4[%c0_58, %c0_59] : memref<128x128xbf16, #tpu.memory_space<vmem>>, vector<128x128xbf16>
    %cst_60 = arith.constant dense<0.000000e+00> : vector<64x128xf32>
    %222 = tpu.matmul %220, %221, %cst_60 {dimension_numbers = #tpu.dot_dimension_numbers<[1], [0], [0], [1], [0, 0, 1, 1], [], []>} : vector<64x128xbf16>, vector<128x128xbf16>, vector<64x128xf32> -> vector<64x128xf32>
    %c0_61 = arith.constant 0 : index
    %c0_62 = arith.constant 0 : index
    %223 = vector.load %arg5[%c0_61, %c0_62] : memref<1x128xf32, #tpu.memory_space<vmem>>, vector<1x128xf32>
    %224 = vector.broadcast %223 : vector<1x128xf32> to vector<64x128xf32>
    %225 = arith.addf %222, %224 : vector<64x128xf32>
    %226 = vector.shape_cast %225 : vector<64x128xf32> to vector<8x8x128xf32>
    %c0_63 = arith.constant 0 : index
    %c0_64 = arith.constant 0 : index
    %c0_65 = arith.constant 0 : index
    %227 = vector.load %arg6[%c0_63, %c0_64, %c0_65] : memref<8x8x128xf32, #tpu.memory_space<vmem>>, vector<8x8x128xf32>
    tpu.vector_store %arg6[%c0_63, %c0_64, %c0_65], %226 {strides = array<i32>} : memref<8x8x128xf32, #tpu.memory_space<vmem>>, vector<8x8x128xf32>,
    %c0_66 = arith.constant 0 : index
    %c0_67 = arith.constant 0 : index
    %228 = vector.load %arg7[%c0_66, %c0_67] : memref<8x32xf32, #tpu.memory_space<vmem>>, vector<8x32xf32>
    tpu.vector_store %arg7[%c0_66, %c0_67], %216 {strides = array<i32>} : memref<8x32xf32, #tpu.memory_space<vmem>>, vector<8x32xf32>,
    %c0_68 = arith.constant 0 : index
    %c0_69 = arith.constant 0 : index
    %229 = vector.load %arg8[%c0_68, %c0_69] : memref<8x32xf32, #tpu.memory_space<vmem>>, vector<8x32xf32>
    tpu.vector_store %arg8[%c0_68, %c0_69], %214 {strides = array<i32>} : memref<8x32xf32, #tpu.memory_space<vmem>>, vector<8x32xf32>,
    return
  }
}

</mosaic_0001>

<llo_original>
// kernel: tpu_custom_call.1
$region0: #{tpu_custom_call.1}
  #allocation0 [shape = 'u32[]', space=smem, size = 0x4, offset = 0x4, fixed_abs, tag = 'smem constant byte address 0x4 - core index']
  #allocation1 [shape = 'u32[144,128]{1,0:T(1,128)}', space=vmem, size = 0x12000, scoped, tag = 'internal scratch']
  #allocation2 [shape = 'f32[64,128]{1,0:T(8,128)}', space=vmem, size = 0x8000, scoped, tag = 'scratch operand']
  #allocation3 [shape = 'f32[64,128]{1,0:T(8,128)}', space=vmem, size = 0x8000, scoped, tag = 'scratch operand']
  %s0 = inlined_call_operand.vmem [shape: s32[64,1], index: 0, kind: input, shape index: {}]
  %s1 = inlined_call_operand.vmem [shape: bf16[32,128], index: 1, kind: input, shape index: {}]
  %s2 = inlined_call_operand.hbm [shape: bf16[32,128], index: 2, kind: input, shape index: {}]
  %s3 = inlined_call_operand.hbm [shape: f32[1,128], index: 3, kind: input, shape index: {}]
  %s4 = inlined_call_operand.vmem [shape: bf16[128,128], index: 4, kind: input, shape index: {}]
  %s5 = inlined_call_operand.vmem [shape: f32[1,128], index: 5, kind: input, shape index: {}]
  %s6 = inlined_call_operand.hbm [shape: f32[8,8,128], index: 6, kind: output, shape index: {0}]
  %s7 = inlined_call_operand.hbm [shape: f32[8,32], index: 7, kind: output, shape index: {1}]
  %s8 = inlined_call_operand.hbm [shape: f32[8,32], index: 8, kind: output, shape index: {2}]
  %9 = xla_tuple %s6, %s7, %s8
  %s10 = sld [smem:[#allocation0]]
  $region58: #{tpu_custom_call.1} parent=0
    _
  %s12 = ssub.s32 1, %s10
  %s13 = scalar_select 0, %s12, %s10
  $region1: #{tpu_custom_call.1} parent=0
    #allocation4 [shape = 'u8[8192]{0}', space=vmem, size = 0x2000, scoped, tag = 'input window, operand 2, single buffered']
    #allocation5 [shape = 's32[1]{0}', space=sflag, size = 0x4, scoped, tag = 'scoped memory for tpu_custom_call.1']
    #allocation6 [shape = 's32[1]{0}', space=sflag, size = 0x4, scoped, tag = 'scoped memory for tpu_custom_call.1']
    #allocation7 [shape = 'u8[512]{0}', space=vmem, size = 0x400, scoped, tag = 'input window, operand 3, single buffered']
    #allocation8 [shape = 's32[1]{0}', space=sflag, size = 0x4, scoped, tag = 'scoped memory for tpu_custom_call.1']
    #allocation9 [shape = 'u8[32768]{0}', space=vmem, size = 0x8000, scoped, tag = 'output window, operand 0, single buffered']
    #allocation10 [shape = 'u8[4096]{0}', space=vmem, size = 0x1000, scoped, tag = 'output window, operand 1, single buffered']
    #allocation11 [shape = 's32[1]{0}', space=sflag, size = 0x4, scoped, tag = 'scoped memory for tpu_custom_call.1']
    #allocation12 [shape = 'u8[4096]{0}', space=vmem, size = 0x1000, scoped, tag = 'output window, operand 2, single buffered']
    %14 = vsyncpa [#allocation5], 0
    %15 = vsyncpa [#allocation8], 0
    %16 = vsyncpa [#allocation6], 0
    %17 = vsyncpa [#allocation11], 0
    // Predicated region
    $region2: #{tpu_custom_call.1} parent=1 // pred_check
      _
    $region3: #{tpu_custom_call.1} parent=1 // pred_check_branch
      %19 = sbr.rel (0) target = $region5
    $region4: #{tpu_custom_call.1} parent=1 // pred_region
      _
    $region5: #{tpu_custom_call.1} parent=1 // pred_fallthru
      _
    // Predicated region
    $region6: #{tpu_custom_call.1} parent=1 // pred_check
      _
    $region7: #{tpu_custom_call.1} parent=1 // pred_check_branch
      %21 = sbr.rel (0) target = $region9
    $region8: #{tpu_custom_call.1} parent=1 // pred_region
      _
    $region9: #{tpu_custom_call.1} parent=1 // pred_fallthru
      _
    // Predicated region
    $region10: #{tpu_custom_call.1} parent=1 // pred_check
      _
    $region11: #{tpu_custom_call.1} parent=1 // pred_check_branch
      %23 = sbr.rel (0) target = $region13
    $region12: #{tpu_custom_call.1} parent=1 // pred_region
      %s25 = ssub.s32 256, 256
      %26 = vsyncadd [#allocation5], %s25
      %s27 = sshll.u32 [#allocation4], 4
      %s28 = int_to_ptr.vmem [resolvable:$true] %s27
      %33 = dma.hbm_to_vmem [thread:$0]  %s2, 256, %s28, [#allocation5], 64, 64, 4
    $region13: #{tpu_custom_call.1} parent=1 // pred_fallthru
      _
    // Predicated region
    $region14: #{tpu_custom_call.1} parent=1 // pred_check
      _
    $region15: #{tpu_custom_call.1} parent=1 // pred_check_branch
      %35 = sbr.rel (0) target = $region17
    $region16: #{tpu_custom_call.1} parent=1 // pred_region
      %s37 = ssub.s32 16, 16
      %38 = vsyncadd [#allocation8], %s37
      %s40 = sshll.u32 [#allocation7], 4
      %s41 = int_to_ptr.vmem [resolvable:$true] %s40
      %43 = dma.hbm_to_vmem [thread:$0]  %s3, 16, %s41, [#allocation8]
    $region17: #{tpu_custom_call.1} parent=1 // pred_fallthru
      _
    // Predicated region
    $region18: #{tpu_custom_call.1} parent=1 // pred_check
      _
    $region19: #{tpu_custom_call.1} parent=1 // pred_check_branch
      %45 = sbr.rel (0) target = $region21
    $region20: #{tpu_custom_call.1} parent=1 // pred_region
      _
    $region21: #{tpu_custom_call.1} parent=1 // pred_fallthru
      _
    // Predicated region
    $region22: #{tpu_custom_call.1} parent=1 // pred_check
      _
    $region23: #{tpu_custom_call.1} parent=1 // pred_check_branch
      %47 = sbr.rel (0) target = $region25
    $region24: #{tpu_custom_call.1} parent=1 // pred_region
      _
    $region25: #{tpu_custom_call.1} parent=1 // pred_fallthru
      _
    // Predicated region
    $region26: #{tpu_custom_call.1} parent=1 // pred_check
      _
    $region27: #{tpu_custom_call.1} parent=1 // pred_check_branch
      %49 = sbr.rel (0) target = $region29
    $region28: #{tpu_custom_call.1} parent=1 // pred_region
      %50 = dma.done [#allocation5], 256
    $region29: #{tpu_custom_call.1} parent=1 // pred_fallthru
      _
    // Predicated region
    $region30: #{tpu_custom_call.1} parent=1 // pred_check
      _
    $region31: #{tpu_custom_call.1} parent=1 // pred_check_branch
      %52 = sbr.rel (0) target = $region33
    $region32: #{tpu_custom_call.1} parent=1 // pred_region
      %53 = dma.done [#allocation8], 16
    $region33: #{tpu_custom_call.1} parent=1 // pred_fallthru
      _
    %v55 = vld [vmem:[%s0] sm:$0xff]
    %v56 = vld [vmem:[%s0 + $0x8] sm:$0xff]
    %v57 = vld [vmem:[%s0 + $0x10] sm:$0xff]
    %v58 = vld [vmem:[%s0 + $0x18] sm:$0xff]
    %v59 = vld [vmem:[%s0 + $0x20] sm:$0xff]
    %v60 = vld [vmem:[%s0 + $0x28] sm:$0xff]
    %v61 = vld [vmem:[%s0 + $0x30] sm:$0xff]
    %v62 = vld [vmem:[%s0 + $0x38] sm:$0xff]
    %v63 = vlaneseq
    %v64 = vand.u32 %v63, 127
    %65 = vset.pattern.permute.xlu0 0
    %66 = vperm.xlu0 %65, %v55
    %v67 = vpop.permute.xlu0 %66
    %68 = vset.pattern.permute.xlu0 0
    %69 = vperm.xlu0 %68, %v56
    %v70 = vpop.permute.xlu0 %69
    %71 = vset.pattern.permute.xlu0 0
    %72 = vperm.xlu0 %71, %v57
    %v73 = vpop.permute.xlu0 %72
    %74 = vset.pattern.permute.xlu0 0
    %75 = vperm.xlu0 %74, %v58
    %v76 = vpop.permute.xlu0 %75
    %77 = vset.pattern.permute.xlu0 0
    %78 = vperm.xlu0 %77, %v59
    %v79 = vpop.permute.xlu0 %78
    %80 = vset.pattern.permute.xlu0 0
    %81 = vperm.xlu0 %80, %v60
    %v82 = vpop.permute.xlu0 %81
    %83 = vset.pattern.permute.xlu0 0
    %84 = vperm.xlu0 %83, %v61
    %v85 = vpop.permute.xlu0 %84
    %86 = vset.pattern.permute.xlu0 0
    %87 = vperm.xlu0 %86, %v62
    %v88 = vpop.permute.xlu0 %87
    %vm89 = vcmp.eq.s32.totalorder %v67, %v64
    %vm90 = vcmp.eq.s32.totalorder %v70, %v64
    %vm91 = vcmp.eq.s32.totalorder %v73, %v64
    %vm92 = vcmp.eq.s32.totalorder %v76, %v64
    %vm93 = vcmp.eq.s32.totalorder %v79, %v64
    %vm94 = vcmp.eq.s32.totalorder %v82, %v64
    %vm95 = vcmp.eq.s32.totalorder %v85, %v64
    %vm96 = vcmp.eq.s32.totalorder %v88, %v64
    %v97 = vsel %vm89, 1.0, 0.0
    %v98 = vsel %vm90, 1.0, 0.0
    %v99 = vsel %vm91, 1.0, 0.0
    %v100 = vsel %vm92, 1.0, 0.0
    %v101 = vsel %vm93, 1.0, 0.0
    %v102 = vsel %vm94, 1.0, 0.0
    %v103 = vsel %vm95, 1.0, 0.0
    %v104 = vsel %vm96, 1.0, 0.0
    %v105 = vpack.c.bf16 %v98, %v97
    %v106 = vpack.c.bf16 %v100, %v99
    %v107 = vpack.c.bf16 %v102, %v101
    %v108 = vpack.c.bf16 %v104, %v103
    %v109 = vld [vmem:[%s1] sm:$0xf]
    %v110 = vld [vmem:[%s1 + $0x4] sm:$0xf]
    %v111 = vld [vmem:[%s1 + $0x8] sm:$0xf]
    %v112 = vld [vmem:[%s1 + $0xc] sm:$0xf]
    %v113 = vld [vmem:[#allocation7] sm:$0x1]
    %v115 = vlaneseq
    %v116 = vshrl.u32 %v115, 7
    %v117 = vsub.s32 0, %v116
    %v118 = vrot.slane %v113, %v117
    %v124 = vunpack.c.l.b16 %v109
    %v125 = vunpack.c.l.b16 %v110
    %v126 = vunpack.c.l.b16 %v111
    %v127 = vunpack.c.l.b16 %v112
    %v128 = vpack.c.b16 %v125, %v124
    %v129 = vpack.c.b16 %v127, %v126
    %vm132 = vcmask 261120
    %v134 = vsel %vm132, %v105, 0
    %v137 = vsel %vm132, %v106, 0
    %v140 = vsel %vm132, %v107, 0
    %v143 = vsel %vm132, %v108, 0
    %145 = vmatprep.subr.bf16.mxu0 0
    %146 = vmatpush1.bf16.msra.mxu0 %v128
    %147 = vmatprep.subr.bf16.mxu0 0
    %148 = vmatpush1.bf16.msra.mxu0 %v129
    %149 = vmatprep.subr.bf16.mxu0 0
    %150 = vmatpush1.bf16.msra.mxu0 0
    %151 = vmatprep.subr.bf16.mxu0 0
    %152 = vmatpush1.bf16.msra.mxu0 0
    %153 = vmatprep.subr.bf16.mxu0 0
    %154 = vmatpush1.bf16.msra.mxu0 0
    %155 = vmatprep.subr.bf16.mxu0 0
    %156 = vmatpush1.bf16.msra.mxu0 0
    %157 = vmatprep.subr.bf16.mxu0 0
    %158 = vmatpush1.bf16.msra.mxu0 0
    %159 = vmatprep.subr.bf16.mxu0 0
    %160 = vmatpush1.bf16.msra.mxu0 0
    %161 = vmatprep.subr.bf16.mxu0 0
    %162 = vmatpush1.bf16.msra.mxu0 0
    %163 = vmatprep.subr.bf16.mxu0 0
    %164 = vmatpush1.bf16.msra.mxu0 0
    %165 = vmatprep.subr.bf16.mxu0 0
    %166 = vmatpush1.bf16.msra.mxu0 0
    %167 = vmatprep.subr.bf16.mxu0 0
    %168 = vmatpush1.bf16.msra.mxu0 0
    %169 = vmatprep.subr.bf16.mxu0 0
    %170 = vmatpush1.bf16.msra.mxu0 0
    %171 = vmatprep.subr.bf16.mxu0 0
    %172 = vmatpush1.bf16.msra.mxu0 0
    %173 = vmatprep.subr.bf16.mxu0 0
    %174 = vmatpush1.bf16.msra.mxu0 0
    %175 = vmatprep.subr.bf16.mxu0 0
    %176 = vmatpush1.bf16.msra.mxu0 0
    %177 = vmatprep.mubr.bf16.mxu0 0
    %178 = vmatmul.mubr.bf16.gmra.mrb[0].mxu0 %v134
    %v179 = vpop.f32.mrb[0].mxu0
    %v180 = vadd.f32 %v118, %v179
    %v181 = vpop.f32.mrb[0].mxu0
    %v182 = vpop.f32.mrb[0].mxu0
    %v183 = vadd.f32 %v118, %v182
    %v184 = vpop.f32.mrb[0].mxu0
    %185 = vmatprep.mubr.bf16.mxu0 0
    %186 = vmatmul.mubr.bf16.gmra.mrb[0].mxu0 %v137
    %v187 = vpop.f32.mrb[0].mxu0
    %v188 = vadd.f32 %v118, %v187
    %v189 = vpop.f32.mrb[0].mxu0
    %v190 = vpop.f32.mrb[0].mxu0
    %v191 = vadd.f32 %v118, %v190
    %v192 = vpop.f32.mrb[0].mxu0
    %193 = vmatprep.mubr.bf16.mxu0 0
    %194 = vmatmul.mubr.bf16.gmra.mrb[0].mxu0 %v140
    %v195 = vpop.f32.mrb[0].mxu0
    %v196 = vadd.f32 %v118, %v195
    %v197 = vpop.f32.mrb[0].mxu0
    %v198 = vpop.f32.mrb[0].mxu0
    %v199 = vadd.f32 %v118, %v198
    %v200 = vpop.f32.mrb[0].mxu0
    %201 = vmatprep.mubr.bf16.mxu0 0
    %202 = vmatmul.mubr.bf16.gmra.mrb[0].mxu0 %v143
    %v203 = vpop.f32.mrb[0].mxu0
    %v204 = vadd.f32 %v118, %v203
    %v205 = vpop.f32.mrb[0].mxu0
    %v206 = vpop.f32.mrb[0].mxu0
    %v207 = vadd.f32 %v118, %v206
    %v208 = vpop.f32.mrb[0].mxu0
    %209 = vdwg.mxu0
    %210 = vst [vmem:[#allocation2] sm:$0xff] %v180
    %211 = vst [vmem:[#allocation2 + $0x8] sm:$0xff] %v183
    %212 = vst [vmem:[#allocation2 + $0x10] sm:$0xff] %v188
    %213 = vst [vmem:[#allocation2 + $0x18] sm:$0xff] %v191
    %214 = vst [vmem:[#allocation2 + $0x20] sm:$0xff] %v196
    %215 = vst [vmem:[#allocation2 + $0x28] sm:$0xff] %v199
    %216 = vst [vmem:[#allocation2 + $0x30] sm:$0xff] %v204
    %217 = vst [vmem:[#allocation2 + $0x38] sm:$0xff] %v207
    %218 = vst [vmem:[#allocation3] sm:$0xff] 0.0
    %219 = vst [vmem:[#allocation3 + $0x8] sm:$0xff] 0.0
    %220 = vst [vmem:[#allocation3 + $0x10] sm:$0xff] 0.0
    %221 = vst [vmem:[#allocation3 + $0x18] sm:$0xff] 0.0
    %222 = vst [vmem:[#allocation3 + $0x20] sm:$0xff] 0.0
    %223 = vst [vmem:[#allocation3 + $0x28] sm:$0xff] 0.0
    %224 = vst [vmem:[#allocation3 + $0x30] sm:$0xff] 0.0
    %225 = vst [vmem:[#allocation3 + $0x38] sm:$0xff] 0.0
    %v226 = vld [vmem:[#allocation4] sm:$0xf]
    %v227 = vld [vmem:[#allocation4 + $0x4] sm:$0xf]
    %v228 = vld [vmem:[#allocation4 + $0x8] sm:$0xf]
    %v229 = vld [vmem:[#allocation4 + $0xc] sm:$0xf]
    %v230 = vld [vmem:[#allocation2] sm:$0xff]
    %v235 = vunpack.c.l.b16 %v226
    %v236 = vunpack.c.l.b16 %v227
    %v237 = vunpack.c.l.b16 %v228
    %v238 = vunpack.c.l.b16 %v229
    %v239 = vpack.c.b16 %v236, %v235
    %v240 = vpack.c.b16 %v238, %v237
    %v244 = vsel %vm132, 0, 0
    %246 = vmatprep.subr.bf16.mxu0 0
    %247 = vmatpush1.bf16.msra.mxu0 %v239
    %248 = vmatprep.subr.bf16.mxu0 0
    %249 = vmatpush1.bf16.msra.mxu0 %v240
    %250 = vmatprep.subr.bf16.mxu0 0
    %251 = vmatpush1.bf16.msra.mxu0 0
    %252 = vmatprep.subr.bf16.mxu0 0
    %253 = vmatpush1.bf16.msra.mxu0 0
    %254 = vmatprep.subr.bf16.mxu0 0
    %255 = vmatpush1.bf16.msra.mxu0 0
    %256 = vmatprep.subr.bf16.mxu0 0
    %257 = vmatpush1.bf16.msra.mxu0 0
    %258 = vmatprep.subr.bf16.mxu0 0
    %259 = vmatpush1.bf16.msra.mxu0 0
    %260 = vmatprep.subr.bf16.mxu0 0
    %261 = vmatpush1.bf16.msra.mxu0 0
    %262 = vmatprep.subr.bf16.mxu0 0
    %263 = vmatpush1.bf16.msra.mxu0 0
    %264 = vmatprep.subr.bf16.mxu0 0
    %265 = vmatpush1.bf16.msra.mxu0 0
    %266 = vmatprep.subr.bf16.mxu0 0
    %267 = vmatpush1.bf16.msra.mxu0 0
    %268 = vmatprep.subr.bf16.mxu0 0
    %269 = vmatpush1.bf16.msra.mxu0 0
    %270 = vmatprep.subr.bf16.mxu0 0
    %271 = vmatpush1.bf16.msra.mxu0 0
    %272 = vmatprep.subr.bf16.mxu0 0
    %273 = vmatpush1.bf16.msra.mxu0 0
    %274 = vmatprep.subr.bf16.mxu0 0
    %275 = vmatpush1.bf16.msra.mxu0 0
    %276 = vmatprep.subr.bf16.mxu0 0
    %277 = vmatpush1.bf16.msra.mxu0 0
    %278 = vmatprep.mubr.bf16.mxu0 0
    %279 = vmatmul.mubr.bf16.gmra.mrb[0].mxu0 %v244
    %v280 = vpop.f32.mrb[0].mxu0
    %v281 = vadd.f32 0.0, %v280
    %v282 = vpop.f32.mrb[0].mxu0
    %v283 = vpop.f32.mrb[0].mxu0
    %v284 = vpop.f32.mrb[0].mxu0
    %285 = vdwg.mxu0
    %v286 = vadd.f32 %v230, %v281
    %v287 = vxor.u32 %v286, 2147483648
    %v288 = vmul.f32 %v287, 1.442695
    %v289 = vpow.pop %v288
    %v290 = vadd.f32 %v289, 1.0
    %v291 = vrcp.pop %v290
    %v292 = vmul.f32 1.0, %v291
    %v293 = vtanh.pop %v286
    %v294 = vmul.f32 %v292, 0.0
    %296 = vrot.lane.b32.xlu0 %v293, 32
    %v297 = vpop.permute.xlu0 %296
    %v299 = vmul.f32 %v292, %v297
    %301 = vrot.lane.b32.xlu0 %v299, 32
    %v302 = vpop.permute.xlu0 %301
    %v304 = vadd.f32 %v294, %v302
    %v305 = vtanh.pop %v304
    %307 = vrot.lane.b32.xlu0 %v305, 32
    %v308 = vpop.permute.xlu0 %307
    %v310 = vmul.f32 %v292, %v308
    %312 = vrot.lane.b32.xlu0 %v310, 64
    %v313 = vpop.permute.xlu0 %312
    %315 = vst.msk [vmem:[#allocation3] sm:$0xff] %vm132, %v313
    %s316 = scalar_lea.vmem [#allocation2], 8
    %v317 = vld [vmem:[%s316] sm:$0xff]
    %v318 = vpack.c.bf16 %v310, %v310
    %320 = vrot.lane.b32.xlu0 %v318, 64
    %v321 = vpop.permute.xlu0 %320
    %v323 = vsel %vm132, %v321, 0
    %325 = vmatprep.subr.bf16.mxu0 0
    %326 = vmatpush1.bf16.msra.mxu0 %v239
    %327 = vmatprep.subr.bf16.mxu0 0
    %328 = vmatpush1.bf16.msra.mxu0 %v240
    %329 = vmatprep.subr.bf16.mxu0 0
    %330 = vmatpush1.bf16.msra.mxu0 0
    %331 = vmatprep.subr.bf16.mxu0 0
    %332 = vmatpush1.bf16.msra.mxu0 0
    %333 = vmatprep.subr.bf16.mxu0 0
    %334 = vmatpush1.bf16.msra.mxu0 0
    %335 = vmatprep.subr.bf16.mxu0 0
    %336 = vmatpush1.bf16.msra.mxu0 0
    %337 = vmatprep.subr.bf16.mxu0 0
    %338 = vmatpush1.bf16.msra.mxu0 0
    %339 = vmatprep.subr.bf16.mxu0 0
    %340 = vmatpush1.bf16.msra.mxu0 0
    %341 = vmatprep.subr.bf16.mxu0 0
    %342 = vmatpush1.bf16.msra.mxu0 0
    %343 = vmatprep.subr.bf16.mxu0 0
    %344 = vmatpush1.bf16.msra.mxu0 0
    %345 = vmatprep.subr.bf16.mxu0 0
    %346 = vmatpush1.bf16.msra.mxu0 0
    %347 = vmatprep.subr.bf16.mxu0 0
    %348 = vmatpush1.bf16.msra.mxu0 0
    %349 = vmatprep.subr.bf16.mxu0 0
    %350 = vmatpush1.bf16.msra.mxu0 0
    %351 = vmatprep.subr.bf16.mxu0 0
    %352 = vmatpush1.bf16.msra.mxu0 0
    %353 = vmatprep.subr.bf16.mxu0 0
    %354 = vmatpush1.bf16.msra.mxu0 0
    %355 = vmatprep.subr.bf16.mxu0 0
    %356 = vmatpush1.bf16.msra.mxu0 0
    %357 = vmatprep.mubr.bf16.mxu0 0
    %358 = vmatmul.mubr.bf16.gmra.mrb[0].mxu0 %v323
    %v359 = vpop.f32.mrb[0].mxu0
    %v360 = vadd.f32 0.0, %v359
    %v361 = vpop.f32.mrb[0].mxu0
    %v362 = vpop.f32.mrb[0].mxu0
    %v363 = vpop.f32.mrb[0].mxu0
    %364 = vdwg.mxu0
    %v365 = vadd.f32 %v317, %v360
    %v366 = vxor.u32 %v365, 2147483648
    %v367 = vmul.f32 %v366, 1.442695
    %v368 = vpow.pop %v367
    %v369 = vadd.f32 %v368, 1.0
    %v370 = vrcp.pop %v369
    %v371 = vmul.f32 1.0, %v370
    %v372 = vtanh.pop %v365
    %v373 = vmul.f32 %v371, %v304
    %375 = vrot.lane.b32.xlu0 %v372, 32
    %v376 = vpop.permute.xlu0 %375
    %v378 = vmul.f32 %v371, %v376
    %380 = vrot.lane.b32.xlu0 %v378, 32
    %v381 = vpop.permute.xlu0 %380
    %v383 = vadd.f32 %v373, %v381
    %v384 = vtanh.pop %v383
    %386 = vrot.lane.b32.xlu0 %v384, 32
    %v387 = vpop.permute.xlu0 %386
    %v389 = vmul.f32 %v371, %v387
    %391 = vrot.lane.b32.xlu0 %v389, 64
    %v392 = vpop.permute.xlu0 %391
    %s394 = scalar_lea.vmem [#allocation3], 8
    %395 = vst.msk [vmem:[%s394] sm:$0xff] %vm132, %v392
    %s396 = scalar_lea.vmem [#allocation2], 16
    %v397 = vld [vmem:[%s396] sm:$0xff]
    %v398 = vpack.c.bf16 %v389, %v389
    %400 = vrot.lane.b32.xlu0 %v398, 64
    %v401 = vpop.permute.xlu0 %400
    %v403 = vsel %vm132, %v401, 0
    %405 = vmatprep.subr.bf16.mxu0 0
    %406 = vmatpush1.bf16.msra.mxu0 %v239
    %407 = vmatprep.subr.bf16.mxu0 0
    %408 = vmatpush1.bf16.msra.mxu0 %v240
    %409 = vmatprep.subr.bf16.mxu0 0
    %410 = vmatpush1.bf16.msra.mxu0 0
    %411 = vmatprep.subr.bf16.mxu0 0
    %412 = vmatpush1.bf16.msra.mxu0 0
    %413 = vmatprep.subr.bf16.mxu0 0
    %414 = vmatpush1.bf16.msra.mxu0 0
    %415 = vmatprep.subr.bf16.mxu0 0
    %416 = vmatpush1.bf16.msra.mxu0 0
    %417 = vmatprep.subr.bf16.mxu0 0
    %418 = vmatpush1.bf16.msra.mxu0 0
    %419 = vmatprep.subr.bf16.mxu0 0
    %420 = vmatpush1.bf16.msra.mxu0 0
    %421 = vmatprep.subr.bf16.mxu0 0
    %422 = vmatpush1.bf16.msra.mxu0 0
    %423 = vmatprep.subr.bf16.mxu0 0
    %424 = vmatpush1.bf16.msra.mxu0 0
    %425 = vmatprep.subr.bf16.mxu0 0
    %426 = vmatpush1.bf16.msra.mxu0 0
    %427 = vmatprep.subr.bf16.mxu0 0
    %428 = vmatpush1.bf16.msra.mxu0 0
    %429 = vmatprep.subr.bf16.mxu0 0
    %430 = vmatpush1.bf16.msra.mxu0 0
    %431 = vmatprep.subr.bf16.mxu0 0
    %432 = vmatpush1.bf16.msra.mxu0 0
    %433 = vmatprep.subr.bf16.mxu0 0
    %434 = vmatpush1.bf16.msra.mxu0 0
    %435 = vmatprep.subr.bf16.mxu0 0
    %436 = vmatpush1.bf16.msra.mxu0 0
    %437 = vmatprep.mubr.bf16.mxu0 0
    %438 = vmatmul.mubr.bf16.gmra.mrb[0].mxu0 %v403
    %v439 = vpop.f32.mrb[0].mxu0
    %v440 = vadd.f32 0.0, %v439
    %v441 = vpop.f32.mrb[0].mxu0
    %v442 = vpop.f32.mrb[0].mxu0
    %v443 = vpop.f32.mrb[0].mxu0
    %444 = vdwg.mxu0
    %v445 = vadd.f32 %v397, %v440
    %v446 = vxor.u32 %v445, 2147483648
    %v447 = vmul.f32 %v446, 1.442695
    %v448 = vpow.pop %v447
    %v449 = vadd.f32 %v448, 1.0
    %v450 = vrcp.pop %v449
    %v451 = vmul.f32 1.0, %v450
    %v452 = vtanh.pop %v445
    %v453 = vmul.f32 %v451, %v383
    %455 = vrot.lane.b32.xlu0 %v452, 32
    %v456 = vpop.permute.xlu0 %455
    %v458 = vmul.f32 %v451, %v456
    %460 = vrot.lane.b32.xlu0 %v458, 32
    %v461 = vpop.permute.xlu0 %460
    %v463 = vadd.f32 %v453, %v461
    %v464 = vtanh.pop %v463
    %466 = vrot.lane.b32.xlu0 %v464, 32
    %v467 = vpop.permute.xlu0 %466
    %v469 = vmul.f32 %v451, %v467
    %471 = vrot.lane.b32.xlu0 %v469, 64
    %v472 = vpop.permute.xlu0 %471
    %s474 = scalar_lea.vmem [#allocation3], 16
    %475 = vst.msk [vmem:[%s474] sm:$0xff] %vm132, %v472
    %s476 = scalar_lea.vmem [#allocation2], 24
    %v477 = vld [vmem:[%s476] sm:$0xff]
    %v478 = vpack.c.bf16 %v469, %v469
    %480 = vrot.lane.b32.xlu0 %v478, 64
    %v481 = vpop.permute.xlu0 %480
    %v483 = vsel %vm132, %v481, 0
    %485 = vmatprep.subr.bf16.mxu0 0
    %486 = vmatpush1.bf16.msra.mxu0 %v239
    %487 = vmatprep.subr.bf16.mxu0 0
    %488 = vmatpush1.bf16.msra.mxu0 %v240
    %489 = vmatprep.subr.bf16.mxu0 0
    %490 = vmatpush1.bf16.msra.mxu0 0
    %491 = vmatprep.subr.bf16.mxu0 0
    %492 = vmatpush1.bf16.msra.mxu0 0
    %493 = vmatprep.subr.bf16.mxu0 0
    %494 = vmatpush1.bf16.msra.mxu0 0
    %495 = vmatprep.subr.bf16.mxu0 0
    %496 = vmatpush1.bf16.msra.mxu0 0
    %497 = vmatprep.subr.bf16.mxu0 0
    %498 = vmatpush1.bf16.msra.mxu0 0
    %499 = vmatprep.subr.bf16.mxu0 0
    %500 = vmatpush1.bf16.msra.mxu0 0
    %501 = vmatprep.subr.bf16.mxu0 0
    %502 = vmatpush1.bf16.msra.mxu0 0
    %503 = vmatprep.subr.bf16.mxu0 0
    %504 = vmatpush1.bf16.msra.mxu0 0
    %505 = vmatprep.subr.bf16.mxu0 0
    %506 = vmatpush1.bf16.msra.mxu0 0
    %507 = vmatprep.subr.bf16.mxu0 0
    %508 = vmatpush1.bf16.msra.mxu0 0
    %509 = vmatprep.subr.bf16.mxu0 0
    %510 = vmatpush1.bf16.msra.mxu0 0
    %511 = vmatprep.subr.bf16.mxu0 0
    %512 = vmatpush1.bf16.msra.mxu0 0
    %513 = vmatprep.subr.bf16.mxu0 0
    %514 = vmatpush1.bf16.msra.mxu0 0
    %515 = vmatprep.subr.bf16.mxu0 0
    %516 = vmatpush1.bf16.msra.mxu0 0
    %517 = vmatprep.mubr.bf16.mxu0 0
    %518 = vmatmul.mubr.bf16.gmra.mrb[0].mxu0 %v483
    %v519 = vpop.f32.mrb[0].mxu0
    %v520 = vadd.f32 0.0, %v519
    %v521 = vpop.f32.mrb[0].mxu0
    %v522 = vpop.f32.mrb[0].mxu0
    %v523 = vpop.f32.mrb[0].mxu0
    %524 = vdwg.mxu0
    %v525 = vadd.f32 %v477, %v520
    %v526 = vxor.u32 %v525, 2147483648
    %v527 = vmul.f32 %v526, 1.442695
    %v528 = vpow.pop %v527
    %v529 = vadd.f32 %v528, 1.0
    %v530 = vrcp.pop %v529
    %v531 = vmul.f32 1.0, %v530
    %v532 = vtanh.pop %v525
    %v533 = vmul.f32 %v531, %v463
    %535 = vrot.lane.b32.xlu0 %v532, 32
    %v536 = vpop.permute.xlu0 %535
    %v538 = vmul.f32 %v531, %v536
    %540 = vrot.lane.b32.xlu0 %v538, 32
    %v541 = vpop.permute.xlu0 %540
    %v543 = vadd.f32 %v533, %v541
    %v544 = vtanh.pop %v543
    %546 = vrot.lane.b32.xlu0 %v544, 32
    %v547 = vpop.permute.xlu0 %546
    %v549 = vmul.f32 %v531, %v547
    %551 = vrot.lane.b32.xlu0 %v549, 64
    %v552 = vpop.permute.xlu0 %551
    %s554 = scalar_lea.vmem [#allocation3], 24
    %555 = vst.msk [vmem:[%s554] sm:$0xff] %vm132, %v552
    %s556 = scalar_lea.vmem [#allocation2], 32
    %v557 = vld [vmem:[%s556] sm:$0xff]
    %v558 = vpack.c.bf16 %v549, %v549
    %560 = vrot.lane.b32.xlu0 %v558, 64
    %v561 = vpop.permute.xlu0 %560
    %v563 = vsel %vm132, %v561, 0
    %565 = vmatprep.subr.bf16.mxu0 0
    %566 = vmatpush1.bf16.msra.mxu0 %v239
    %567 = vmatprep.subr.bf16.mxu0 0
    %568 = vmatpush1.bf16.msra.mxu0 %v240
    %569 = vmatprep.subr.bf16.mxu0 0
    %570 = vmatpush1.bf16.msra.mxu0 0
    %571 = vmatprep.subr.bf16.mxu0 0
    %572 = vmatpush1.bf16.msra.mxu0 0
    %573 = vmatprep.subr.bf16.mxu0 0
    %574 = vmatpush1.bf16.msra.mxu0 0
    %575 = vmatprep.subr.bf16.mxu0 0
    %576 = vmatpush1.bf16.msra.mxu0 0
    %577 = vmatprep.subr.bf16.mxu0 0
    %578 = vmatpush1.bf16.msra.mxu0 0
    %579 = vmatprep.subr.bf16.mxu0 0
    %580 = vmatpush1.bf16.msra.mxu0 0
    %581 = vmatprep.subr.bf16.mxu0 0
    %582 = vmatpush1.bf16.msra.mxu0 0
    %583 = vmatprep.subr.bf16.mxu0 0
    %584 = vmatpush1.bf16.msra.mxu0 0
    %585 = vmatprep.subr.bf16.mxu0 0
    %586 = vmatpush1.bf16.msra.mxu0 0
    %587 = vmatprep.subr.bf16.mxu0 0
    %588 = vmatpush1.bf16.msra.mxu0 0
    %589 = vmatprep.subr.bf16.mxu0 0
    %590 = vmatpush1.bf16.msra.mxu0 0
    %591 = vmatprep.subr.bf16.mxu0 0
    %592 = vmatpush1.bf16.msra.mxu0 0
    %593 = vmatprep.subr.bf16.mxu0 0
    %594 = vmatpush1.bf16.msra.mxu0 0
    %595 = vmatprep.subr.bf16.mxu0 0
    %596 = vmatpush1.bf16.msra.mxu0 0
    %597 = vmatprep.mubr.bf16.mxu0 0
    %598 = vmatmul.mubr.bf16.gmra.mrb[0].mxu0 %v563
    %v599 = vpop.f32.mrb[0].mxu0
    %v600 = vadd.f32 0.0, %v599
    %v601 = vpop.f32.mrb[0].mxu0
    %v602 = vpop.f32.mrb[0].mxu0
    %v603 = vpop.f32.mrb[0].mxu0
    %604 = vdwg.mxu0
    %v605 = vadd.f32 %v557, %v600
    %v606 = vxor.u32 %v605, 2147483648
    %v607 = vmul.f32 %v606, 1.442695
    %v608 = vpow.pop %v607
    %v609 = vadd.f32 %v608, 1.0
    %v610 = vrcp.pop %v609
    %v611 = vmul.f32 1.0, %v610
    %v612 = vtanh.pop %v605
    %v613 = vmul.f32 %v611, %v543
    %615 = vrot.lane.b32.xlu0 %v612, 32
    %v616 = vpop.permute.xlu0 %615
    %v618 = vmul.f32 %v611, %v616
    %620 = vrot.lane.b32.xlu0 %v618, 32
    %v621 = vpop.permute.xlu0 %620
    %v623 = vadd.f32 %v613, %v621
    %v624 = vtanh.pop %v623
    %626 = vrot.lane.b32.xlu0 %v624, 32
    %v627 = vpop.permute.xlu0 %626
    %v629 = vmul.f32 %v611, %v627
    %631 = vrot.lane.b32.xlu0 %v629, 64
    %v632 = vpop.permute.xlu0 %631
    %s634 = scalar_lea.vmem [#allocation3], 32
    %635 = vst.msk [vmem:[%s634] sm:$0xff] %vm132, %v632
    %s636 = scalar_lea.vmem [#allocation2], 40
    %v637 = vld [vmem:[%s636] sm:$0xff]
    %v638 = vpack.c.bf16 %v629, %v629
    %640 = vrot.lane.b32.xlu0 %v638, 64
    %v641 = vpop.permute.xlu0 %640
    %v643 = vsel %vm132, %v641, 0
    %645 = vmatprep.subr.bf16.mxu0 0
    %646 = vmatpush1.bf16.msra.mxu0 %v239
    %647 = vmatprep.subr.bf16.mxu0 0
    %648 = vmatpush1.bf16.msra.mxu0 %v240
    %649 = vmatprep.subr.bf16.mxu0 0
    %650 = vmatpush1.bf16.msra.mxu0 0
    %651 = vmatprep.subr.bf16.mxu0 0
    %652 = vmatpush1.bf16.msra.mxu0 0
    %653 = vmatprep.subr.bf16.mxu0 0
    %654 = vmatpush1.bf16.msra.mxu0 0
    %655 = vmatprep.subr.bf16.mxu0 0
    %656 = vmatpush1.bf16.msra.mxu0 0
    %657 = vmatprep.subr.bf16.mxu0 0
    %658 = vmatpush1.bf16.msra.mxu0 0
    %659 = vmatprep.subr.bf16.mxu0 0
    %660 = vmatpush1.bf16.msra.mxu0 0
    %661 = vmatprep.subr.bf16.mxu0 0
    %662 = vmatpush1.bf16.msra.mxu0 0
    %663 = vmatprep.subr.bf16.mxu0 0
    %664 = vmatpush1.bf16.msra.mxu0 0
    %665 = vmatprep.subr.bf16.mxu0 0
    %666 = vmatpush1.bf16.msra.mxu0 0
    %667 = vmatprep.subr.bf16.mxu0 0
    %668 = vmatpush1.bf16.msra.mxu0 0
    %669 = vmatprep.subr.bf16.mxu0 0
    %670 = vmatpush1.bf16.msra.mxu0 0
    %671 = vmatprep.subr.bf16.mxu0 0
    %672 = vmatpush1.bf16.msra.mxu0 0
    %673 = vmatprep.subr.bf16.mxu0 0
    %674 = vmatpush1.bf16.msra.mxu0 0
    %675 = vmatprep.subr.bf16.mxu0 0
    %676 = vmatpush1.bf16.msra.mxu0 0
    %677 = vmatprep.mubr.bf16.mxu0 0
    %678 = vmatmul.mubr.bf16.gmra.mrb[0].mxu0 %v643
    %v679 = vpop.f32.mrb[0].mxu0
    %v680 = vadd.f32 0.0, %v679
    %v681 = vpop.f32.mrb[0].mxu0
    %v682 = vpop.f32.mrb[0].mxu0
    %v683 = vpop.f32.mrb[0].mxu0
    %684 = vdwg.mxu0
    %v685 = vadd.f32 %v637, %v680
    %v686 = vxor.u32 %v685, 2147483648
    %v687 = vmul.f32 %v686, 1.442695
    %v688 = vpow.pop %v687
    %v689 = vadd.f32 %v688, 1.0
    %v690 = vrcp.pop %v689
    %v691 = vmul.f32 1.0, %v690
    %v692 = vtanh.pop %v685
    %v693 = vmul.f32 %v691, %v623
    %695 = vrot.lane.b32.xlu0 %v692, 32
    %v696 = vpop.permute.xlu0 %695
    %v698 = vmul.f32 %v691, %v696
    %700 = vrot.lane.b32.xlu0 %v698, 32
    %v701 = vpop.permute.xlu0 %700
    %v703 = vadd.f32 %v693, %v701
    %v704 = vtanh.pop %v703
    %706 = vrot.lane.b32.xlu0 %v704, 32
    %v707 = vpop.permute.xlu0 %706
    %v709 = vmul.f32 %v691, %v707
    %711 = vrot.lane.b32.xlu0 %v709, 64
    %v712 = vpop.permute.xlu0 %711
    %s714 = scalar_lea.vmem [#allocation3], 40
    %715 = vst.msk [vmem:[%s714] sm:$0xff] %vm132, %v712
    %s716 = scalar_lea.vmem [#allocation2], 48
    %v717 = vld [vmem:[%s716] sm:$0xff]
    %v718 = vpack.c.bf16 %v709, %v709
    %720 = vrot.lane.b32.xlu0 %v718, 64
    %v721 = vpop.permute.xlu0 %720
    %v723 = vsel %vm132, %v721, 0
    %725 = vmatprep.subr.bf16.mxu0 0
    %726 = vmatpush1.bf16.msra.mxu0 %v239
    %727 = vmatprep.subr.bf16.mxu0 0
    %728 = vmatpush1.bf16.msra.mxu0 %v240
    %729 = vmatprep.subr.bf16.mxu0 0
    %730 = vmatpush1.bf16.msra.mxu0 0
    %731 = vmatprep.subr.bf16.mxu0 0
    %732 = vmatpush1.bf16.msra.mxu0 0
    %733 = vmatprep.subr.bf16.mxu0 0
    %734 = vmatpush1.bf16.msra.mxu0 0
    %735 = vmatprep.subr.bf16.mxu0 0
    %736 = vmatpush1.bf16.msra.mxu0 0
    %737 = vmatprep.subr.bf16.mxu0 0
    %738 = vmatpush1.bf16.msra.mxu0 0
    %739 = vmatprep.subr.bf16.mxu0 0
    %740 = vmatpush1.bf16.msra.mxu0 0
    %741 = vmatprep.subr.bf16.mxu0 0
    %742 = vmatpush1.bf16.msra.mxu0 0
    %743 = vmatprep.subr.bf16.mxu0 0
    %744 = vmatpush1.bf16.msra.mxu0 0
    %745 = vmatprep.subr.bf16.mxu0 0
    %746 = vmatpush1.bf16.msra.mxu0 0
    %747 = vmatprep.subr.bf16.mxu0 0
    %748 = vmatpush1.bf16.msra.mxu0 0
    %749 = vmatprep.subr.bf16.mxu0 0
    %750 = vmatpush1.bf16.msra.mxu0 0
    %751 = vmatprep.subr.bf16.mxu0 0
    %752 = vmatpush1.bf16.msra.mxu0 0
    %753 = vmatprep.subr.bf16.mxu0 0
    %754 = vmatpush1.bf16.msra.mxu0 0
    %755 = vmatprep.subr.bf16.mxu0 0
    %756 = vmatpush1.bf16.msra.mxu0 0
    %757 = vmatprep.mubr.bf16.mxu0 0
    %758 = vmatmul.mubr.bf16.gmra.mrb[0].mxu0 %v723
    %v759 = vpop.f32.mrb[0].mxu0
    %v760 = vadd.f32 0.0, %v759
    %v761 = vpop.f32.mrb[0].mxu0
    %v762 = vpop.f32.mrb[0].mxu0
    %v763 = vpop.f32.mrb[0].mxu0
    %764 = vdwg.mxu0
    %v765 = vadd.f32 %v717, %v760
    %v766 = vxor.u32 %v765, 2147483648
    %v767 = vmul.f32 %v766, 1.442695
    %v768 = vpow.pop %v767
    %v769 = vadd.f32 %v768, 1.0
    %v770 = vrcp.pop %v769
    %v771 = vmul.f32 1.0, %v770
    %v772 = vtanh.pop %v765
    %v773 = vmul.f32 %v771, %v703
    %775 = vrot.lane.b32.xlu0 %v772, 32
    %v776 = vpop.permute.xlu0 %775
    %v778 = vmul.f32 %v771, %v776
    %780 = vrot.lane.b32.xlu0 %v778, 32
    %v781 = vpop.permute.xlu0 %780
    %v783 = vadd.f32 %v773, %v781
    %v784 = vtanh.pop %v783
    %786 = vrot.lane.b32.xlu0 %v784, 32
    %v787 = vpop.permute.xlu0 %786
    %v789 = vmul.f32 %v771, %v787
    %791 = vrot.lane.b32.xlu0 %v789, 64
    %v792 = vpop.permute.xlu0 %791
    %s794 = scalar_lea.vmem [#allocation3], 48
    %795 = vst.msk [vmem:[%s794] sm:$0xff] %vm132, %v792
    %s796 = scalar_lea.vmem [#allocation2], 56
    %v797 = vld [vmem:[%s796] sm:$0xff]
    %v798 = vpack.c.bf16 %v789, %v789
    %800 = vrot.lane.b32.xlu0 %v798, 64
    %v801 = vpop.permute.xlu0 %800
    %v803 = vsel %vm132, %v801, 0
    %805 = vmatprep.subr.bf16.mxu0 0
    %806 = vmatpush1.bf16.msra.mxu0 %v239
    %807 = vmatprep.subr.bf16.mxu0 0
    %808 = vmatpush1.bf16.msra.mxu0 %v240
    %809 = vmatprep.subr.bf16.mxu0 0
    %810 = vmatpush1.bf16.msra.mxu0 0
    %811 = vmatprep.subr.bf16.mxu0 0
    %812 = vmatpush1.bf16.msra.mxu0 0
    %813 = vmatprep.subr.bf16.mxu0 0
    %814 = vmatpush1.bf16.msra.mxu0 0
    %815 = vmatprep.subr.bf16.mxu0 0
    %816 = vmatpush1.bf16.msra.mxu0 0
    %817 = vmatprep.subr.bf16.mxu0 0
    %818 = vmatpush1.bf16.msra.mxu0 0
    %819 = vmatprep.subr.bf16.mxu0 0
    %820 = vmatpush1.bf16.msra.mxu0 0
    %821 = vmatprep.subr.bf16.mxu0 0
    %822 = vmatpush1.bf16.msra.mxu0 0
    %823 = vmatprep.subr.bf16.mxu0 0
    %824 = vmatpush1.bf16.msra.mxu0 0
    %825 = vmatprep.subr.bf16.mxu0 0
    %826 = vmatpush1.bf16.msra.mxu0 0
    %827 = vmatprep.subr.bf16.mxu0 0
    %828 = vmatpush1.bf16.msra.mxu0 0
    %829 = vmatprep.subr.bf16.mxu0 0
    %830 = vmatpush1.bf16.msra.mxu0 0
    %831 = vmatprep.subr.bf16.mxu0 0
    %832 = vmatpush1.bf16.msra.mxu0 0
    %833 = vmatprep.subr.bf16.mxu0 0
    %834 = vmatpush1.bf16.msra.mxu0 0
    %835 = vmatprep.subr.bf16.mxu0 0
    %836 = vmatpush1.bf16.msra.mxu0 0
    %837 = vmatprep.mubr.bf16.mxu0 0
    %838 = vmatmul.mubr.bf16.gmra.mrb[0].mxu0 %v803
    %v839 = vpop.f32.mrb[0].mxu0
    %v840 = vadd.f32 0.0, %v839
    %v841 = vpop.f32.mrb[0].mxu0
    %v842 = vpop.f32.mrb[0].mxu0
    %v843 = vpop.f32.mrb[0].mxu0
    %844 = vdwg.mxu0
    %v845 = vadd.f32 %v797, %v840
    %v846 = vxor.u32 %v845, 2147483648
    %v847 = vmul.f32 %v846, 1.442695
    %v848 = vpow.pop %v847
    %v849 = vadd.f32 %v848, 1.0
    %v850 = vrcp.pop %v849
    %v851 = vmul.f32 1.0, %v850
    %v852 = vtanh.pop %v845
    %v853 = vmul.f32 %v851, %v783
    %855 = vrot.lane.b32.xlu0 %v852, 32
    %v856 = vpop.permute.xlu0 %855
    %v858 = vmul.f32 %v851, %v856
    %860 = vrot.lane.b32.xlu0 %v858, 32
    %v861 = vpop.permute.xlu0 %860
    %v863 = vadd.f32 %v853, %v861
    %v864 = vtanh.pop %v863
    %866 = vrot.lane.b32.xlu0 %v864, 32
    %v867 = vpop.permute.xlu0 %866
    %v869 = vmul.f32 %v851, %v867
    %871 = vrot.lane.b32.xlu0 %v869, 64
    %v872 = vpop.permute.xlu0 %871
    %s874 = scalar_lea.vmem [#allocation3], 56
    %875 = vst.msk [vmem:[%s874] sm:$0xff] %vm132, %v872
    %v876 = vld [vmem:[#allocation3] sm:$0xff]
    %v877 = vld [vmem:[#allocation3 + $0x8] sm:$0xff]
    %v878 = vld [vmem:[#allocation3 + $0x10] sm:$0xff]
    %v879 = vld [vmem:[#allocation3 + $0x18] sm:$0xff]
    %v880 = vld [vmem:[#allocation3 + $0x20] sm:$0xff]
    %v881 = vld [vmem:[#allocation3 + $0x28] sm:$0xff]
    %v882 = vld [vmem:[#allocation3 + $0x30] sm:$0xff]
    %v883 = vld [vmem:[#allocation3 + $0x38] sm:$0xff]
    %v884 = vpack.c.bf16 %v877, %v876
    %v885 = vpack.c.bf16 %v879, %v878
    %v886 = vpack.c.bf16 %v881, %v880
    %v887 = vpack.c.bf16 %v883, %v882
    %v888 = vld [vmem:[%s4] sm:$0xf]
    %v889 = vld [vmem:[%s4 + $0x4] sm:$0xf]
    %v890 = vld [vmem:[%s4 + $0x8] sm:$0xf]
    %v891 = vld [vmem:[%s4 + $0xc] sm:$0xf]
    %v892 = vld [vmem:[%s4 + $0x10] sm:$0xf]
    %v893 = vld [vmem:[%s4 + $0x14] sm:$0xf]
    %v894 = vld [vmem:[%s4 + $0x18] sm:$0xf]
    %v895 = vld [vmem:[%s4 + $0x1c] sm:$0xf]
    %v896 = vld [vmem:[%s4 + $0x20] sm:$0xf]
    %v897 = vld [vmem:[%s4 + $0x24] sm:$0xf]
    %v898 = vld [vmem:[%s4 + $0x28] sm:$0xf]
    %v899 = vld [vmem:[%s4 + $0x2c] sm:$0xf]
    %v900 = vld [vmem:[%s4 + $0x30] sm:$0xf]
    %v901 = vld [vmem:[%s4 + $0x34] sm:$0xf]
    %v902 = vld [vmem:[%s4 + $0x38] sm:$0xf]
    %v903 = vld [vmem:[%s4 + $0x3c] sm:$0xf]
    %v904 = vld [vmem:[%s5] sm:$0x1]
    %v906 = vlaneseq
    %v907 = vshrl.u32 %v906, 7
    %v908 = vsub.s32 0, %v907
    %v909 = vrot.slane %v904, %v908
    %v927 = vunpack.c.l.b16 %v888
    %v928 = vunpack.c.l.b16 %v889
    %v929 = vunpack.c.l.b16 %v890
    %v930 = vunpack.c.l.b16 %v891
    %v931 = vunpack.c.l.b16 %v892
    %v932 = vunpack.c.l.b16 %v893
    %v933 = vunpack.c.l.b16 %v894
    %v934 = vunpack.c.l.b16 %v895
    %v935 = vunpack.c.l.b16 %v896
    %v936 = vunpack.c.l.b16 %v897
    %v937 = vunpack.c.l.b16 %v898
    %v938 = vunpack.c.l.b16 %v899
    %v939 = vunpack.c.l.b16 %v900
    %v940 = vunpack.c.l.b16 %v901
    %v941 = vunpack.c.l.b16 %v902
    %v942 = vunpack.c.l.b16 %v903
    %v943 = vpack.c.b16 %v928, %v927
    %v944 = vpack.c.b16 %v930, %v929
    %v945 = vpack.c.b16 %v932, %v931
    %v946 = vpack.c.b16 %v934, %v933
    %v947 = vpack.c.b16 %v936, %v935
    %v948 = vpack.c.b16 %v938, %v937
    %v949 = vpack.c.b16 %v940, %v939
    %v950 = vpack.c.b16 %v942, %v941
    %959 = vmatprep.subr.bf16.mxu0 0
    %960 = vmatpush1.bf16.msra.mxu0 %v943
    %961 = vmatprep.subr.bf16.mxu0 0
    %962 = vmatpush1.bf16.msra.mxu0 %v944
    %963 = vmatprep.subr.bf16.mxu0 0
    %964 = vmatpush1.bf16.msra.mxu0 %v945
    %965 = vmatprep.subr.bf16.mxu0 0
    %966 = vmatpush1.bf16.msra.mxu0 %v946
    %967 = vmatprep.subr.bf16.mxu0 0
    %968 = vmatpush1.bf16.msra.mxu0 %v947
    %969 = vmatprep.subr.bf16.mxu0 0
    %970 = vmatpush1.bf16.msra.mxu0 %v948
    %971 = vmatprep.subr.bf16.mxu0 0
    %972 = vmatpush1.bf16.msra.mxu0 %v949
    %973 = vmatprep.subr.bf16.mxu0 0
    %974 = vmatpush1.bf16.msra.mxu0 %v950
    %975 = vmatprep.subr.bf16.mxu0 0
    %976 = vmatpush1.bf16.msra.mxu0 0
    %977 = vmatprep.subr.bf16.mxu0 0
    %978 = vmatpush1.bf16.msra.mxu0 0
    %979 = vmatprep.subr.bf16.mxu0 0
    %980 = vmatpush1.bf16.msra.mxu0 0
    %981 = vmatprep.subr.bf16.mxu0 0
    %982 = vmatpush1.bf16.msra.mxu0 0
    %983 = vmatprep.subr.bf16.mxu0 0
    %984 = vmatpush1.bf16.msra.mxu0 0
    %985 = vmatprep.subr.bf16.mxu0 0
    %986 = vmatpush1.bf16.msra.mxu0 0
    %987 = vmatprep.subr.bf16.mxu0 0
    %988 = vmatpush1.bf16.msra.mxu0 0
    %989 = vmatprep.subr.bf16.mxu0 0
    %990 = vmatpush1.bf16.msra.mxu0 0
    %991 = vmatprep.mubr.bf16.mxu0 0
    %992 = vmatmul.mubr.bf16.gmra.mrb[0].mxu0 %v884
    %v993 = vpop.f32.mrb[0].mxu0
    %v994 = vadd.f32 %v909, %v993
    %v995 = vpop.f32.mrb[0].mxu0
    %v996 = vpop.f32.mrb[0].mxu0
    %v997 = vadd.f32 %v909, %v996
    %v998 = vpop.f32.mrb[0].mxu0
    %999 = vmatprep.mubr.bf16.mxu0 0
    %1000 = vmatmul.mubr.bf16.gmra.mrb[0].mxu0 %v885
    %v1001 = vpop.f32.mrb[0].mxu0
    %v1002 = vadd.f32 %v909, %v1001
    %v1003 = vpop.f32.mrb[0].mxu0
    %v1004 = vpop.f32.mrb[0].mxu0
    %v1005 = vadd.f32 %v909, %v1004
    %v1006 = vpop.f32.mrb[0].mxu0
    %1007 = vmatprep.mubr.bf16.mxu0 0
    %1008 = vmatmul.mubr.bf16.gmra.mrb[0].mxu0 %v886
    %v1009 = vpop.f32.mrb[0].mxu0
    %v1010 = vadd.f32 %v909, %v1009
    %v1011 = vpop.f32.mrb[0].mxu0
    %v1012 = vpop.f32.mrb[0].mxu0
    %v1013 = vadd.f32 %v909, %v1012
    %v1014 = vpop.f32.mrb[0].mxu0
    %1015 = vmatprep.mubr.bf16.mxu0 0
    %1016 = vmatmul.mubr.bf16.gmra.mrb[0].mxu0 %v887
    %v1017 = vpop.f32.mrb[0].mxu0
    %v1018 = vadd.f32 %v909, %v1017
    %v1019 = vpop.f32.mrb[0].mxu0
    %v1020 = vpop.f32.mrb[0].mxu0
    %v1021 = vadd.f32 %v909, %v1020
    %v1022 = vpop.f32.mrb[0].mxu0
    %1023 = vdwg.mxu0
    %1024 = vst [vmem:[#allocation9] sm:$0xff] %v994
    %1025 = vst [vmem:[#allocation9 + $0x8] sm:$0xff] %v997
    %1026 = vst [vmem:[#allocation9 + $0x10] sm:$0xff] %v1002
    %1027 = vst [vmem:[#allocation9 + $0x18] sm:$0xff] %v1005
    %1028 = vst [vmem:[#allocation9 + $0x20] sm:$0xff] %v1010
    %1029 = vst [vmem:[#allocation9 + $0x28] sm:$0xff] %v1013
    %1030 = vst [vmem:[#allocation9 + $0x30] sm:$0xff] %v1018
    %1031 = vst [vmem:[#allocation9 + $0x38] sm:$0xff] %v1021
    %1032 = vst.msk [vmem:[#allocation10] sm:$0xff] %vm132, %v872
    %1034 = vrot.lane.b32.xlu0 %v863, 96
    %v1035 = vpop.permute.xlu0 %1034
    %1037 = vst.msk [vmem:[#allocation12] sm:$0xff] %vm132, %v1035
    // Predicated region
    $region34: #{tpu_custom_call.1} parent=1 // pred_check
      _
    $region35: #{tpu_custom_call.1} parent=1 // pred_check_branch
      %1039 = sbr.rel (0) target = $region37
    $region36: #{tpu_custom_call.1} parent=1 // pred_region
      %s1041 = ssub.s32 1024, 1024
      %1042 = vsyncadd [#allocation6], %s1041
      %s1043 = sshll.u32 [#allocation9], 4
      %s1044 = int_to_ptr.vmem [resolvable:$true] %s1043
      %1049 = dma.vmem_to_hbm [thread:$0]  %s1044, 1024, %s6, [#allocation6], 128, 128, 8
    $region37: #{tpu_custom_call.1} parent=1 // pred_fallthru
      _
    // Predicated region
    $region38: #{tpu_custom_call.1} parent=1 // pred_check
      _
    $region39: #{tpu_custom_call.1} parent=1 // pred_check_branch
      %1051 = sbr.rel (0) target = $region41
    $region40: #{tpu_custom_call.1} parent=1 // pred_region
      %s1053 = ssub.s32 128, 128
      %1054 = vsyncadd [#allocation11], %s1053
      %s1056 = sshll.u32 [#allocation10], 4
      %s1057 = int_to_ptr.vmem [resolvable:$true] %s1056
      %1059 = dma.vmem_to_hbm [thread:$0]  %s1057, 128, %s7, [#allocation11]
    $region41: #{tpu_custom_call.1} parent=1 // pred_fallthru
      _
    // Predicated region
    $region42: #{tpu_custom_call.1} parent=1 // pred_check
      _
    $region43: #{tpu_custom_call.1} parent=1 // pred_check_branch
      %1061 = sbr.rel (0) target = $region45
    $region44: #{tpu_custom_call.1} parent=1 // pred_region
      %s1063 = ssub.s32 128, 128
      %1064 = vsyncadd [#allocation11], %s1063
      %s1066 = sshll.u32 [#allocation12], 4
      %s1067 = int_to_ptr.vmem [resolvable:$true] %s1066
      %1069 = dma.vmem_to_hbm [thread:$0]  %s1067, 128, %s8, [#allocation11]
    $region45: #{tpu_custom_call.1} parent=1 // pred_fallthru
      _
    // Predicated region
    $region46: #{tpu_custom_call.1} parent=1 // pred_check
      _
    $region47: #{tpu_custom_call.1} parent=1 // pred_check_branch
      %1071 = sbr.rel (0) target = $region49
    $region48: #{tpu_custom_call.1} parent=1 // pred_region
      %1072 = dma.done [#allocation6], 1024
    $region49: #{tpu_custom_call.1} parent=1 // pred_fallthru
      _
    // Predicated region
    $region50: #{tpu_custom_call.1} parent=1 // pred_check
      _
    $region51: #{tpu_custom_call.1} parent=1 // pred_check_branch
      %1074 = sbr.rel (0) target = $region53
    $region52: #{tpu_custom_call.1} parent=1 // pred_region
      %1075 = dma.done [#allocation11], 128
    $region53: #{tpu_custom_call.1} parent=1 // pred_fallthru
      _
    // Predicated region
    $region54: #{tpu_custom_call.1} parent=1 // pred_check
      _
    $region55: #{tpu_custom_call.1} parent=1 // pred_check_branch
      %1077 = sbr.rel (0) target = $region57
    $region56: #{tpu_custom_call.1} parent=1 // pred_region
      %1078 = dma.done [#allocation11], 128
    $region57: #{tpu_custom_call.1} parent=1 // pred_fallthru
      _
    %1079 = vsyncpa [#allocation5], 1
    %1080 = vsyncpa [#allocation8], 1
    %1081 = vsyncpa [#allocation6], 1
    %1082 = vsyncpa [#allocation11], 1

</llo_original>
